<compile_context>
chip_gen: v7x
topology: tpu7x:2x2x1
jax: 0.10.0
libtpu: 0.0.40
codegen_flags: <defaults>
</compile_context>

<pallas_src>
import math

import jax
import jax.numpy as jnp
from jax.experimental import pallas as pl

# ----------------------------- model config ---------------------------------
S = 8          # query sequence length
S_KV = 8       # key/value sequence length
B = 2          # batch
D_MODEL = 32   # d_model
NHEAD = 4
HEAD_DIM = D_MODEL // NHEAD
KDIM = 48      # kdim = vdim (module default is 1024; small here)
DIM_FF = 64    # dim_feedforward
LN_EPS = 1e-5

N_ROWS = B * S            # folded (batch*seq) rows for the query stream
N_KV_ROWS = B * S_KV      # folded (batch*seq) rows for the key/value stream
VEC_W = max(2 * D_MODEL, DIM_FF)   # 64: lane width of the packed 1-D parameter rows


def _layernorm(x, gamma, beta):
    # x: (N, D); gamma/beta: (1, D). Biased variance, matching torch LayerNorm.
    mean = jnp.mean(x, axis=-1, keepdims=True)
    var = jnp.mean((x - mean) ** 2, axis=-1, keepdims=True)
    inv = jax.lax.rsqrt(var + LN_EPS)
    return (x - mean) * inv * gamma + beta


def encoder_layer_kernel(x_ref, y_ref, wq_ref, wkv_ref, wo_ref, w1_ref, w2_ref,
                         vec_ref, o_ref):
    x = x_ref[...]        # (N_ROWS, D_MODEL)   rows ordered (b, s), batch-major
    y = y_ref[...]        # (N_KV_ROWS, KDIM)
    vecs = vec_ref[...]   # (9, VEC_W) packed biases / LayerNorm params

    bq = vecs[0:1, :D_MODEL]
    bkv = vecs[1:2, :2 * D_MODEL]
    bo = vecs[2:3, :D_MODEL]
    b1 = vecs[3:4, :DIM_FF]
    b2 = vecs[4:5, :D_MODEL]
    g1 = vecs[5:6, :D_MODEL]
    be1 = vecs[6:7, :D_MODEL]
    g2 = vecs[7:8, :D_MODEL]
    be2 = vecs[8:9, :D_MODEL]

    # ---- input projections (weights pre-transposed host-side: out = act @ W_t + b) ----
    q = jnp.dot(x, wq_ref[...], preferred_element_type=jnp.float32) + bq      # (N, D)
    kv = jnp.dot(y, wkv_ref[...], preferred_element_type=jnp.float32) + bkv   # (Nkv, 2D)
    k = kv[:, :D_MODEL]
    v = kv[:, D_MODEL:]

    # ---- multi-head scaled dot-product attention, batched over B for each head ----
    scale = 1.0 / math.sqrt(HEAD_DIM)
    head_outs = []
    for h in range(NHEAD):
        lo = h * HEAD_DIM
        qh = (q[:, lo:lo + HEAD_DIM] * scale).reshape(B, S, HEAD_DIM)
        kh = k[:, lo:lo + HEAD_DIM].reshape(B, S_KV, HEAD_DIM)
        vh = v[:, lo:lo + HEAD_DIM].reshape(B, S_KV, HEAD_DIM)
        s = jnp.einsum("bqd,bkd->bqk", qh, kh, preferred_element_type=jnp.float32)
        s = s - jnp.max(s, axis=-1, keepdims=True)
        p = jnp.exp(s)
        p = p * pl.reciprocal(jnp.sum(p, axis=-1, keepdims=True), approx=True)
        ctx = jnp.einsum("bqk,bkd->bqd", p, vh, preferred_element_type=jnp.float32)
        head_outs.append(ctx.reshape(N_ROWS, HEAD_DIM))
    attn = jnp.concatenate(head_outs, axis=-1)                                 # (N, D)

    # ---- output projection + residual + norm1 ----
    attn = jnp.dot(attn, wo_ref[...], preferred_element_type=jnp.float32) + bo
    h1 = _layernorm(x + attn, g1, be1)

    # ---- feed-forward (relu) + residual + norm2 ----
    f = jnp.dot(h1, w1_ref[...], preferred_element_type=jnp.float32) + b1
    f = jnp.maximum(f, 0.0)
    f = jnp.dot(f, w2_ref[...], preferred_element_type=jnp.float32) + b2
    o_ref[...] = _layernorm(h1 + f, g2, be2).astype(o_ref.dtype)


def _pack_params(params):
    """Pre-transpose weights, fuse K/V projection, pack 1-D params into one (9, 64)."""
    wq_t = params["wq"].T                                              # (D, D)
    wkv_t = jnp.concatenate([params["wk"], params["wv"]], axis=0).T    # (KDIM, 2D)
    wo_t = params["wo"].T                                              # (D, D)
    w1_t = params["w1"].T                                              # (D, FF)
    w2_t = params["w2"].T                                              # (FF, D)

    def row(vec):
        vec = vec.reshape(1, -1)
        return jnp.pad(vec, ((0, 0), (0, VEC_W - vec.shape[-1])))

    vecs = jnp.concatenate(
        [
            row(params["bq"]),
            row(jnp.concatenate([params["bk"], params["bv"]], axis=-1)),
            row(params["bo"]),
            row(params["b1"]),
            row(params["b2"]),
            row(params["g1"]),
            row(params["be1"]),
            row(params["g2"]),
            row(params["be2"]),
        ],
        axis=0,
    )                                                                  # (9, VEC_W)
    return wq_t, wkv_t, wo_t, w1_t, w2_t, vecs


@jax.jit
def transformer_encoder_layer(src1, src2, params):
    """src1: (S, B, D_MODEL), src2: (S_KV, B, KDIM) -> (S, B, D_MODEL)."""
    xb = jnp.transpose(src1, (1, 0, 2)).reshape(N_ROWS, D_MODEL)       # (B*S, D)
    yb = jnp.transpose(src2, (1, 0, 2)).reshape(N_KV_ROWS, KDIM)       # (B*S_kv, KDIM)
    wq_t, wkv_t, wo_t, w1_t, w2_t, vecs = _pack_params(params)

    out2d = pl.pallas_call(
        encoder_layer_kernel,
        out_shape=jax.ShapeDtypeStruct((N_ROWS, D_MODEL), jnp.float32),
        # No grid: the whole problem fits in VMEM in one shot (all operands become
        # full-array VMEM blocks), eliminating per-grid-step pipeline overhead.
    )(xb, yb, wq_t, wkv_t, wo_t, w1_t, w2_t, vecs)

    return jnp.transpose(out2d.reshape(B, S, D_MODEL), (1, 0, 2))      # (S, B, D)


def init_params(key):
    ks = jax.random.split(key, 8)
    n = lambda k, shape, s=0.05: (jax.random.normal(k, shape, jnp.float32) * s)
    return {
        # MultiheadAttention (kdim=vdim=KDIM => separate q/k/v projection weights)
        "wq": n(ks[0], (D_MODEL, D_MODEL)),
        "wk": n(ks[1], (D_MODEL, KDIM)),
        "wv": n(ks[2], (D_MODEL, KDIM)),
        "bq": jnp.zeros((1, D_MODEL), jnp.float32),
        "bk": jnp.zeros((1, D_MODEL), jnp.float32),
        "bv": jnp.zeros((1, D_MODEL), jnp.float32),
        "wo": n(ks[3], (D_MODEL, D_MODEL)),
        "bo": n(ks[4], (1, D_MODEL), 0.01),
        # Feed-forward
        "w1": n(ks[5], (DIM_FF, D_MODEL)),
        "b1": jnp.zeros((1, DIM_FF), jnp.float32),
        "w2": n(ks[6], (D_MODEL, DIM_FF)),
        "b2": jnp.zeros((1, D_MODEL), jnp.float32),
        # LayerNorms
        "g1": jnp.ones((1, D_MODEL), jnp.float32),
        "be1": jnp.zeros((1, D_MODEL), jnp.float32),
        "g2": jnp.ones((1, D_MODEL), jnp.float32),
        "be2": jnp.zeros((1, D_MODEL), jnp.float32),
    }


if __name__ == "__main__":
    key = jax.random.PRNGKey(0)
    k1, k2, k3 = jax.random.split(key, 3)
    params = init_params(k3)

    src1 = jax.random.normal(k1, (S, B, D_MODEL), jnp.float32)     # query stream
    src2 = jax.random.normal(k2, (S_KV, B, KDIM), jnp.float32)     # key/value stream

    out = transformer_encoder_layer(src1, src2, params)
    jax.block_until_ready(out)
    assert out.shape == (S, B, D_MODEL)
    print("KERNEL_OK")
</pallas_src>

<mosaic_0001>
module attributes {stable_mosaic.version = 11 : i64} {
  func.func @encoder_layer_kernel(%arg0: memref<16x32xf32, #tpu.memory_space<vmem>>, %arg1: memref<16x48xf32, #tpu.memory_space<vmem>>, %arg2: memref<32x32xf32, #tpu.memory_space<vmem>>, %arg3: memref<48x64xf32, #tpu.memory_space<vmem>>, %arg4: memref<32x32xf32, #tpu.memory_space<vmem>>, %arg5: memref<32x64xf32, #tpu.memory_space<vmem>>, %arg6: memref<64x32xf32, #tpu.memory_space<vmem>>, %arg7: memref<9x64xf32, #tpu.memory_space<vmem>>, %arg8: memref<16x32xf32, #tpu.memory_space<vmem>>) attributes {dimension_semantics = [], scalar_prefetch = 0 : i64, scratch_operands = 0 : i64, tpu.core_type = #tpu.core_type<tc>} {
    %c0 = arith.constant 0 : index
    %c0_0 = arith.constant 0 : index
    %0 = vector.load %arg0[%c0, %c0_0] : memref<16x32xf32, #tpu.memory_space<vmem>>, vector<16x32xf32>
    %c0_1 = arith.constant 0 : index
    %c0_2 = arith.constant 0 : index
    %1 = vector.load %arg1[%c0_1, %c0_2] : memref<16x48xf32, #tpu.memory_space<vmem>>, vector<16x48xf32>
    %c0_3 = arith.constant 0 : index
    %c0_4 = arith.constant 0 : index
    %2 = vector.load %arg7[%c0_3, %c0_4] : memref<9x64xf32, #tpu.memory_space<vmem>>, vector<9x64xf32>
    %3 = vector.extract_strided_slice %2 {offsets = [0, 0], sizes = [1, 32], strides = [1, 1]} : vector<9x64xf32> to vector<1x32xf32>
    %4 = vector.extract_strided_slice %2 {offsets = [1, 0], sizes = [1, 64], strides = [1, 1]} : vector<9x64xf32> to vector<1x64xf32>
    %5 = vector.extract_strided_slice %2 {offsets = [2, 0], sizes = [1, 32], strides = [1, 1]} : vector<9x64xf32> to vector<1x32xf32>
    %6 = vector.extract_strided_slice %2 {offsets = [3, 0], sizes = [1, 64], strides = [1, 1]} : vector<9x64xf32> to vector<1x64xf32>
    %7 = vector.extract_strided_slice %2 {offsets = [4, 0], sizes = [1, 32], strides = [1, 1]} : vector<9x64xf32> to vector<1x32xf32>
    %8 = vector.extract_strided_slice %2 {offsets = [5, 0], sizes = [1, 32], strides = [1, 1]} : vector<9x64xf32> to vector<1x32xf32>
    %9 = vector.extract_strided_slice %2 {offsets = [6, 0], sizes = [1, 32], strides = [1, 1]} : vector<9x64xf32> to vector<1x32xf32>
    %10 = vector.extract_strided_slice %2 {offsets = [7, 0], sizes = [1, 32], strides = [1, 1]} : vector<9x64xf32> to vector<1x32xf32>
    %11 = vector.extract_strided_slice %2 {offsets = [8, 0], sizes = [1, 32], strides = [1, 1]} : vector<9x64xf32> to vector<1x32xf32>
    %c0_5 = arith.constant 0 : index
    %c0_6 = arith.constant 0 : index
    %12 = vector.load %arg2[%c0_5, %c0_6] : memref<32x32xf32, #tpu.memory_space<vmem>>, vector<32x32xf32>
    %cst = arith.constant dense<0.000000e+00> : vector<16x32xf32>
    %13 = tpu.matmul %0, %12, %cst {dimension_numbers = #tpu.dot_dimension_numbers<[1], [0], [0], [1], [0, 0, 1, 1], [], []>} : vector<16x32xf32>, vector<32x32xf32>, vector<16x32xf32> -> vector<16x32xf32>
    %14 = vector.broadcast %3 : vector<1x32xf32> to vector<16x32xf32>
    %15 = arith.addf %13, %14 : vector<16x32xf32>
    %c0_7 = arith.constant 0 : index
    %c0_8 = arith.constant 0 : index
    %16 = vector.load %arg3[%c0_7, %c0_8] : memref<48x64xf32, #tpu.memory_space<vmem>>, vector<48x64xf32>
    %cst_9 = arith.constant dense<0.000000e+00> : vector<16x64xf32>
    %17 = tpu.matmul %1, %16, %cst_9 {dimension_numbers = #tpu.dot_dimension_numbers<[1], [0], [0], [1], [0, 0, 1, 1], [], []>} : vector<16x48xf32>, vector<48x64xf32>, vector<16x64xf32> -> vector<16x64xf32>
    %18 = vector.broadcast %4 : vector<1x64xf32> to vector<16x64xf32>
    %19 = arith.addf %17, %18 : vector<16x64xf32>
    %20 = vector.extract_strided_slice %19 {offsets = [0, 0], sizes = [16, 32], strides = [1, 1]} : vector<16x64xf32> to vector<16x32xf32>
    %21 = vector.extract_strided_slice %19 {offsets = [0, 32], sizes = [16, 32], strides = [1, 1]} : vector<16x64xf32> to vector<16x32xf32>
    %22 = vector.extract_strided_slice %15 {offsets = [0, 0], sizes = [16, 8], strides = [1, 1]} : vector<16x32xf32> to vector<16x8xf32>
    %cst_10 = arith.constant 0.353553385 : f32
    %23 = vector.broadcast %cst_10 : f32 to vector<16x8xf32>
    %24 = arith.mulf %22, %23 : vector<16x8xf32>
    %25 = vector.shape_cast %24 : vector<16x8xf32> to vector<2x8x8xf32>
    %26 = vector.extract_strided_slice %20 {offsets = [0, 0], sizes = [16, 8], strides = [1, 1]} : vector<16x32xf32> to vector<16x8xf32>
    %27 = vector.shape_cast %26 : vector<16x8xf32> to vector<2x8x8xf32>
    %28 = vector.extract_strided_slice %21 {offsets = [0, 0], sizes = [16, 8], strides = [1, 1]} : vector<16x32xf32> to vector<16x8xf32>
    %29 = vector.shape_cast %28 : vector<16x8xf32> to vector<2x8x8xf32>
    "tpu.trace_start"() <{level = 10 : i32, message = "bqd,bkd->bqk"}> : () -> ()
    %cst_11 = arith.constant dense<0.000000e+00> : vector<2x8x8xf32>
    %30 = tpu.matmul %25, %27, %cst_11 {dimension_numbers = #tpu.dot_dimension_numbers<[2], [2], [1], [1], [0, 0, 0, 1, 1, 1], [0], [0]>} : vector<2x8x8xf32>, vector<2x8x8xf32>, vector<2x8x8xf32> -> vector<2x8x8xf32>
    "tpu.trace_stop"() : () -> ()
    %cst_12 = arith.constant dense<0xFF800000> : vector<2x8xf32>
    %31 = vector.multi_reduction <maximumf>, %30, %cst_12 [2] : vector<2x8x8xf32> to vector<2x8xf32>
    %32 = vector.shape_cast %31 : vector<2x8xf32> to vector<2x8x1xf32>
    %33 = vector.broadcast %32 : vector<2x8x1xf32> to vector<2x8x8xf32>
    %34 = arith.subf %30, %33 : vector<2x8x8xf32>
    %35 = math.exp %34 : vector<2x8x8xf32>
    %cst_13 = arith.constant dense<0.000000e+00> : vector<2x8xf32>
    %36 = vector.multi_reduction <add>, %35, %cst_13 [2] : vector<2x8x8xf32> to vector<2x8xf32>
    %37 = vector.shape_cast %36 : vector<2x8xf32> to vector<2x8x1xf32>
    %38 = tpu.reciprocal %37 {approx = true} : vector<2x8x1xf32> -> vector<2x8x1xf32>
    %39 = vector.broadcast %38 : vector<2x8x1xf32> to vector<2x8x8xf32>
    %40 = arith.mulf %35, %39 : vector<2x8x8xf32>
    "tpu.trace_start"() <{level = 10 : i32, message = "bqk,bkd->bqd"}> : () -> ()
    %cst_14 = arith.constant dense<0.000000e+00> : vector<2x8x8xf32>
    %41 = tpu.matmul %40, %29, %cst_14 {dimension_numbers = #tpu.dot_dimension_numbers<[2], [1], [1], [2], [0, 0, 0, 1, 1, 2], [0], [0]>} : vector<2x8x8xf32>, vector<2x8x8xf32>, vector<2x8x8xf32> -> vector<2x8x8xf32>
    "tpu.trace_stop"() : () -> ()
    %42 = vector.shape_cast %41 : vector<2x8x8xf32> to vector<16x8xf32>
    %43 = vector.extract_strided_slice %15 {offsets = [0, 8], sizes = [16, 8], strides = [1, 1]} : vector<16x32xf32> to vector<16x8xf32>
    %cst_15 = arith.constant 0.353553385 : f32
    %44 = vector.broadcast %cst_15 : f32 to vector<16x8xf32>
    %45 = arith.mulf %43, %44 : vector<16x8xf32>
    %46 = vector.shape_cast %45 : vector<16x8xf32> to vector<2x8x8xf32>
    %47 = vector.extract_strided_slice %20 {offsets = [0, 8], sizes = [16, 8], strides = [1, 1]} : vector<16x32xf32> to vector<16x8xf32>
    %48 = vector.shape_cast %47 : vector<16x8xf32> to vector<2x8x8xf32>
    %49 = vector.extract_strided_slice %21 {offsets = [0, 8], sizes = [16, 8], strides = [1, 1]} : vector<16x32xf32> to vector<16x8xf32>
    %50 = vector.shape_cast %49 : vector<16x8xf32> to vector<2x8x8xf32>
    "tpu.trace_start"() <{level = 10 : i32, message = "bqd,bkd->bqk"}> : () -> ()
    %cst_16 = arith.constant dense<0.000000e+00> : vector<2x8x8xf32>
    %51 = tpu.matmul %46, %48, %cst_16 {dimension_numbers = #tpu.dot_dimension_numbers<[2], [2], [1], [1], [0, 0, 0, 1, 1, 1], [0], [0]>} : vector<2x8x8xf32>, vector<2x8x8xf32>, vector<2x8x8xf32> -> vector<2x8x8xf32>
    "tpu.trace_stop"() : () -> ()
    %cst_17 = arith.constant dense<0xFF800000> : vector<2x8xf32>
    %52 = vector.multi_reduction <maximumf>, %51, %cst_17 [2] : vector<2x8x8xf32> to vector<2x8xf32>
    %53 = vector.shape_cast %52 : vector<2x8xf32> to vector<2x8x1xf32>
    %54 = vector.broadcast %53 : vector<2x8x1xf32> to vector<2x8x8xf32>
    %55 = arith.subf %51, %54 : vector<2x8x8xf32>
    %56 = math.exp %55 : vector<2x8x8xf32>
    %cst_18 = arith.constant dense<0.000000e+00> : vector<2x8xf32>
    %57 = vector.multi_reduction <add>, %56, %cst_18 [2] : vector<2x8x8xf32> to vector<2x8xf32>
    %58 = vector.shape_cast %57 : vector<2x8xf32> to vector<2x8x1xf32>
    %59 = tpu.reciprocal %58 {approx = true} : vector<2x8x1xf32> -> vector<2x8x1xf32>
    %60 = vector.broadcast %59 : vector<2x8x1xf32> to vector<2x8x8xf32>
    %61 = arith.mulf %56, %60 : vector<2x8x8xf32>
    "tpu.trace_start"() <{level = 10 : i32, message = "bqk,bkd->bqd"}> : () -> ()
    %cst_19 = arith.constant dense<0.000000e+00> : vector<2x8x8xf32>
    %62 = tpu.matmul %61, %50, %cst_19 {dimension_numbers = #tpu.dot_dimension_numbers<[2], [1], [1], [2], [0, 0, 0, 1, 1, 2], [0], [0]>} : vector<2x8x8xf32>, vector<2x8x8xf32>, vector<2x8x8xf32> -> vector<2x8x8xf32>
    "tpu.trace_stop"() : () -> ()
    %63 = vector.shape_cast %62 : vector<2x8x8xf32> to vector<16x8xf32>
    %64 = vector.extract_strided_slice %15 {offsets = [0, 16], sizes = [16, 8], strides = [1, 1]} : vector<16x32xf32> to vector<16x8xf32>
    %cst_20 = arith.constant 0.353553385 : f32
    %65 = vector.broadcast %cst_20 : f32 to vector<16x8xf32>
    %66 = arith.mulf %64, %65 : vector<16x8xf32>
    %67 = vector.shape_cast %66 : vector<16x8xf32> to vector<2x8x8xf32>
    %68 = vector.extract_strided_slice %20 {offsets = [0, 16], sizes = [16, 8], strides = [1, 1]} : vector<16x32xf32> to vector<16x8xf32>
    %69 = vector.shape_cast %68 : vector<16x8xf32> to vector<2x8x8xf32>
    %70 = vector.extract_strided_slice %21 {offsets = [0, 16], sizes = [16, 8], strides = [1, 1]} : vector<16x32xf32> to vector<16x8xf32>
    %71 = vector.shape_cast %70 : vector<16x8xf32> to vector<2x8x8xf32>
    "tpu.trace_start"() <{level = 10 : i32, message = "bqd,bkd->bqk"}> : () -> ()
    %cst_21 = arith.constant dense<0.000000e+00> : vector<2x8x8xf32>
    %72 = tpu.matmul %67, %69, %cst_21 {dimension_numbers = #tpu.dot_dimension_numbers<[2], [2], [1], [1], [0, 0, 0, 1, 1, 1], [0], [0]>} : vector<2x8x8xf32>, vector<2x8x8xf32>, vector<2x8x8xf32> -> vector<2x8x8xf32>
    "tpu.trace_stop"() : () -> ()
    %cst_22 = arith.constant dense<0xFF800000> : vector<2x8xf32>
    %73 = vector.multi_reduction <maximumf>, %72, %cst_22 [2] : vector<2x8x8xf32> to vector<2x8xf32>
    %74 = vector.shape_cast %73 : vector<2x8xf32> to vector<2x8x1xf32>
    %75 = vector.broadcast %74 : vector<2x8x1xf32> to vector<2x8x8xf32>
    %76 = arith.subf %72, %75 : vector<2x8x8xf32>
    %77 = math.exp %76 : vector<2x8x8xf32>
    %cst_23 = arith.constant dense<0.000000e+00> : vector<2x8xf32>
    %78 = vector.multi_reduction <add>, %77, %cst_23 [2] : vector<2x8x8xf32> to vector<2x8xf32>
    %79 = vector.shape_cast %78 : vector<2x8xf32> to vector<2x8x1xf32>
    %80 = tpu.reciprocal %79 {approx = true} : vector<2x8x1xf32> -> vector<2x8x1xf32>
    %81 = vector.broadcast %80 : vector<2x8x1xf32> to vector<2x8x8xf32>
    %82 = arith.mulf %77, %81 : vector<2x8x8xf32>
    "tpu.trace_start"() <{level = 10 : i32, message = "bqk,bkd->bqd"}> : () -> ()
    %cst_24 = arith.constant dense<0.000000e+00> : vector<2x8x8xf32>
    %83 = tpu.matmul %82, %71, %cst_24 {dimension_numbers = #tpu.dot_dimension_numbers<[2], [1], [1], [2], [0, 0, 0, 1, 1, 2], [0], [0]>} : vector<2x8x8xf32>, vector<2x8x8xf32>, vector<2x8x8xf32> -> vector<2x8x8xf32>
    "tpu.trace_stop"() : () -> ()
    %84 = vector.shape_cast %83 : vector<2x8x8xf32> to vector<16x8xf32>
    %85 = vector.extract_strided_slice %15 {offsets = [0, 24], sizes = [16, 8], strides = [1, 1]} : vector<16x32xf32> to vector<16x8xf32>
    %cst_25 = arith.constant 0.353553385 : f32
    %86 = vector.broadcast %cst_25 : f32 to vector<16x8xf32>
    %87 = arith.mulf %85, %86 : vector<16x8xf32>
    %88 = vector.shape_cast %87 : vector<16x8xf32> to vector<2x8x8xf32>
    %89 = vector.extract_strided_slice %20 {offsets = [0, 24], sizes = [16, 8], strides = [1, 1]} : vector<16x32xf32> to vector<16x8xf32>
    %90 = vector.shape_cast %89 : vector<16x8xf32> to vector<2x8x8xf32>
    %91 = vector.extract_strided_slice %21 {offsets = [0, 24], sizes = [16, 8], strides = [1, 1]} : vector<16x32xf32> to vector<16x8xf32>
    %92 = vector.shape_cast %91 : vector<16x8xf32> to vector<2x8x8xf32>
    "tpu.trace_start"() <{level = 10 : i32, message = "bqd,bkd->bqk"}> : () -> ()
    %cst_26 = arith.constant dense<0.000000e+00> : vector<2x8x8xf32>
    %93 = tpu.matmul %88, %90, %cst_26 {dimension_numbers = #tpu.dot_dimension_numbers<[2], [2], [1], [1], [0, 0, 0, 1, 1, 1], [0], [0]>} : vector<2x8x8xf32>, vector<2x8x8xf32>, vector<2x8x8xf32> -> vector<2x8x8xf32>
    "tpu.trace_stop"() : () -> ()
    %cst_27 = arith.constant dense<0xFF800000> : vector<2x8xf32>
    %94 = vector.multi_reduction <maximumf>, %93, %cst_27 [2] : vector<2x8x8xf32> to vector<2x8xf32>
    %95 = vector.shape_cast %94 : vector<2x8xf32> to vector<2x8x1xf32>
    %96 = vector.broadcast %95 : vector<2x8x1xf32> to vector<2x8x8xf32>
    %97 = arith.subf %93, %96 : vector<2x8x8xf32>
    %98 = math.exp %97 : vector<2x8x8xf32>
    %cst_28 = arith.constant dense<0.000000e+00> : vector<2x8xf32>
    %99 = vector.multi_reduction <add>, %98, %cst_28 [2] : vector<2x8x8xf32> to vector<2x8xf32>
    %100 = vector.shape_cast %99 : vector<2x8xf32> to vector<2x8x1xf32>
    %101 = tpu.reciprocal %100 {approx = true} : vector<2x8x1xf32> -> vector<2x8x1xf32>
    %102 = vector.broadcast %101 : vector<2x8x1xf32> to vector<2x8x8xf32>
    %103 = arith.mulf %98, %102 : vector<2x8x8xf32>
    "tpu.trace_start"() <{level = 10 : i32, message = "bqk,bkd->bqd"}> : () -> ()
    %cst_29 = arith.constant dense<0.000000e+00> : vector<2x8x8xf32>
    %104 = tpu.matmul %103, %92, %cst_29 {dimension_numbers = #tpu.dot_dimension_numbers<[2], [1], [1], [2], [0, 0, 0, 1, 1, 2], [0], [0]>} : vector<2x8x8xf32>, vector<2x8x8xf32>, vector<2x8x8xf32> -> vector<2x8x8xf32>
    "tpu.trace_stop"() : () -> ()
    %105 = vector.shape_cast %104 : vector<2x8x8xf32> to vector<16x8xf32>
    %106 = tpu.concatenate %42, %63, %84, %105 in 1 : vector<16x8xf32>, vector<16x8xf32>, vector<16x8xf32>, vector<16x8xf32> -> vector<16x32xf32>
    %c0_30 = arith.constant 0 : index
    %c0_31 = arith.constant 0 : index
    %107 = vector.load %arg4[%c0_30, %c0_31] : memref<32x32xf32, #tpu.memory_space<vmem>>, vector<32x32xf32>
    %cst_32 = arith.constant dense<0.000000e+00> : vector<16x32xf32>
    %108 = tpu.matmul %106, %107, %cst_32 {dimension_numbers = #tpu.dot_dimension_numbers<[1], [0], [0], [1], [0, 0, 1, 1], [], []>} : vector<16x32xf32>, vector<32x32xf32>, vector<16x32xf32> -> vector<16x32xf32>
    %109 = vector.broadcast %5 : vector<1x32xf32> to vector<16x32xf32>
    %110 = arith.addf %108, %109 : vector<16x32xf32>
    %111 = arith.addf %0, %110 : vector<16x32xf32>
    %cst_33 = arith.constant dense<0.000000e+00> : vector<16xf32>
    %112 = vector.multi_reduction <add>, %111, %cst_33 [1] : vector<16x32xf32> to vector<16xf32>
    %113 = vector.shape_cast %112 : vector<16xf32> to vector<16x1xf32>
    %cst_34 = arith.constant 3.200000e+01 : f32
    %114 = vector.broadcast %cst_34 : f32 to vector<16x1xf32>
    %115 = arith.divf %113, %114 : vector<16x1xf32>
    %116 = vector.broadcast %115 : vector<16x1xf32> to vector<16x32xf32>
    %117 = arith.subf %111, %116 : vector<16x32xf32>
    %118 = arith.mulf %117, %117 : vector<16x32xf32>
    %cst_35 = arith.constant dense<0.000000e+00> : vector<16xf32>
    %119 = vector.multi_reduction <add>, %118, %cst_35 [1] : vector<16x32xf32> to vector<16xf32>
    %120 = vector.shape_cast %119 : vector<16xf32> to vector<16x1xf32>
    %cst_36 = arith.constant 3.200000e+01 : f32
    %121 = vector.broadcast %cst_36 : f32 to vector<16x1xf32>
    %122 = arith.divf %120, %121 : vector<16x1xf32>
    %cst_37 = arith.constant 9.99999974E-6 : f32
    %123 = vector.broadcast %cst_37 : f32 to vector<16x1xf32>
    %124 = arith.addf %122, %123 : vector<16x1xf32>
    %125 = math.rsqrt %124 : vector<16x1xf32>
    %126 = vector.broadcast %115 : vector<16x1xf32> to vector<16x32xf32>
    %127 = arith.subf %111, %126 : vector<16x32xf32>
    %128 = vector.broadcast %125 : vector<16x1xf32> to vector<16x32xf32>
    %129 = arith.mulf %127, %128 : vector<16x32xf32>
    %130 = vector.broadcast %8 : vector<1x32xf32> to vector<16x32xf32>
    %131 = arith.mulf %129, %130 : vector<16x32xf32>
    %132 = vector.broadcast %9 : vector<1x32xf32> to vector<16x32xf32>
    %133 = arith.addf %131, %132 : vector<16x32xf32>
    %c0_38 = arith.constant 0 : index
    %c0_39 = arith.constant 0 : index
    %134 = vector.load %arg5[%c0_38, %c0_39] : memref<32x64xf32, #tpu.memory_space<vmem>>, vector<32x64xf32>
    %cst_40 = arith.constant dense<0.000000e+00> : vector<16x64xf32>
    %135 = tpu.matmul %133, %134, %cst_40 {dimension_numbers = #tpu.dot_dimension_numbers<[1], [0], [0], [1], [0, 0, 1, 1], [], []>} : vector<16x32xf32>, vector<32x64xf32>, vector<16x64xf32> -> vector<16x64xf32>
    %136 = vector.broadcast %6 : vector<1x64xf32> to vector<16x64xf32>
    %137 = arith.addf %135, %136 : vector<16x64xf32>
    %cst_41 = arith.constant 0.000000e+00 : f32
    %138 = vector.broadcast %cst_41 : f32 to vector<16x64xf32>
    %139 = arith.maximumf %137, %138 : vector<16x64xf32>
    %c0_42 = arith.constant 0 : index
    %c0_43 = arith.constant 0 : index
    %140 = vector.load %arg6[%c0_42, %c0_43] : memref<64x32xf32, #tpu.memory_space<vmem>>, vector<64x32xf32>
    %cst_44 = arith.constant dense<0.000000e+00> : vector<16x32xf32>
    %141 = tpu.matmul %139, %140, %cst_44 {dimension_numbers = #tpu.dot_dimension_numbers<[1], [0], [0], [1], [0, 0, 1, 1], [], []>} : vector<16x64xf32>, vector<64x32xf32>, vector<16x32xf32> -> vector<16x32xf32>
    %142 = vector.broadcast %7 : vector<1x32xf32> to vector<16x32xf32>
    %143 = arith.addf %141, %142 : vector<16x32xf32>
    %144 = arith.addf %133, %143 : vector<16x32xf32>
    %cst_45 = arith.constant dense<0.000000e+00> : vector<16xf32>
    %145 = vector.multi_reduction <add>, %144, %cst_45 [1] : vector<16x32xf32> to vector<16xf32>
    %146 = vector.shape_cast %145 : vector<16xf32> to vector<16x1xf32>
    %cst_46 = arith.constant 3.200000e+01 : f32
    %147 = vector.broadcast %cst_46 : f32 to vector<16x1xf32>
    %148 = arith.divf %146, %147 : vector<16x1xf32>
    %149 = vector.broadcast %148 : vector<16x1xf32> to vector<16x32xf32>
    %150 = arith.subf %144, %149 : vector<16x32xf32>
    %151 = arith.mulf %150, %150 : vector<16x32xf32>
    %cst_47 = arith.constant dense<0.000000e+00> : vector<16xf32>
    %152 = vector.multi_reduction <add>, %151, %cst_47 [1] : vector<16x32xf32> to vector<16xf32>
    %153 = vector.shape_cast %152 : vector<16xf32> to vector<16x1xf32>
    %cst_48 = arith.constant 3.200000e+01 : f32
    %154 = vector.broadcast %cst_48 : f32 to vector<16x1xf32>
    %155 = arith.divf %153, %154 : vector<16x1xf32>
    %cst_49 = arith.constant 9.99999974E-6 : f32
    %156 = vector.broadcast %cst_49 : f32 to vector<16x1xf32>
    %157 = arith.addf %155, %156 : vector<16x1xf32>
    %158 = math.rsqrt %157 : vector<16x1xf32>
    %159 = vector.broadcast %148 : vector<16x1xf32> to vector<16x32xf32>
    %160 = arith.subf %144, %159 : vector<16x32xf32>
    %161 = vector.broadcast %158 : vector<16x1xf32> to vector<16x32xf32>
    %162 = arith.mulf %160, %161 : vector<16x32xf32>
    %163 = vector.broadcast %10 : vector<1x32xf32> to vector<16x32xf32>
    %164 = arith.mulf %162, %163 : vector<16x32xf32>
    %165 = vector.broadcast %11 : vector<1x32xf32> to vector<16x32xf32>
    %166 = arith.addf %164, %165 : vector<16x32xf32>
    %c0_50 = arith.constant 0 : index
    %c0_51 = arith.constant 0 : index
    %167 = vector.load %arg8[%c0_50, %c0_51] : memref<16x32xf32, #tpu.memory_space<vmem>>, vector<16x32xf32>
    tpu.vector_store %arg8[%c0_50, %c0_51], %166 {strides = array<i32>} : memref<16x32xf32, #tpu.memory_space<vmem>>, vector<16x32xf32>,
    return
  }
}

</mosaic_0001>

<llo_original>
// kernel: transformer_encoder_layer.1
$region0: #{transformer_encoder_layer.1}
  #allocation0 [shape = 'u32[]', space=smem, size = 0x4, offset = 0x4, fixed_abs, tag = 'smem constant byte address 0x4 - core index']
  #allocation1 [shape = 'u32[144,128]{1,0:T(1,128)}', space=vmem, size = 0x12000, scoped, tag = 'internal scratch']
  %s0 = inlined_call_operand.vmem [shape: f32[16,32], index: 0, kind: input, shape index: {}]
  %s1 = inlined_call_operand.vmem [shape: f32[16,48], index: 1, kind: input, shape index: {}]
  %s2 = inlined_call_operand.vmem [shape: f32[32,32], index: 2, kind: input, shape index: {}]
  %s3 = inlined_call_operand.vmem [shape: f32[48,64], index: 3, kind: input, shape index: {}]
  %s4 = inlined_call_operand.vmem [shape: f32[32,32], index: 4, kind: input, shape index: {}]
  %s5 = inlined_call_operand.vmem [shape: f32[32,64], index: 5, kind: input, shape index: {}]
  %s6 = inlined_call_operand.vmem [shape: f32[64,32], index: 6, kind: input, shape index: {}]
  %s7 = inlined_call_operand.vmem [shape: f32[9,64], index: 7, kind: input, shape index: {}]
  %s8 = inlined_call_operand.vmem [shape: f32[16,32], index: 8, kind: output, shape index: {}]
  %s9 = sld [smem:[#allocation0]]
  $region42: #{transformer_encoder_layer.1} parent=0
    _
  %s11 = ssub.s32 1, %s9
  %s12 = scalar_select 0, %s11, %s9
  // Predicated region
  $region2: #{transformer_encoder_layer.1} parent=0 // pred_check
    _
  $region3: #{transformer_encoder_layer.1} parent=0 // pred_check_branch
    %14 = sbr.rel (0) target = $region5
  $region4: #{transformer_encoder_layer.1} parent=0 // pred_region
    _
  $region5: #{transformer_encoder_layer.1} parent=0 // pred_fallthru
    _
  // Predicated region
  $region6: #{transformer_encoder_layer.1} parent=0 // pred_check
    _
  $region7: #{transformer_encoder_layer.1} parent=0 // pred_check_branch
    %16 = sbr.rel (0) target = $region9
  $region8: #{transformer_encoder_layer.1} parent=0 // pred_region
    _
  $region9: #{transformer_encoder_layer.1} parent=0 // pred_fallthru
    _
  // Predicated region
  $region10: #{transformer_encoder_layer.1} parent=0 // pred_check
    _
  $region11: #{transformer_encoder_layer.1} parent=0 // pred_check_branch
    %18 = sbr.rel (0) target = $region13
  $region12: #{transformer_encoder_layer.1} parent=0 // pred_region
    _
  $region13: #{transformer_encoder_layer.1} parent=0 // pred_fallthru
    _
  // Predicated region
  $region14: #{transformer_encoder_layer.1} parent=0 // pred_check
    _
  $region15: #{transformer_encoder_layer.1} parent=0 // pred_check_branch
    %20 = sbr.rel (0) target = $region17
  $region16: #{transformer_encoder_layer.1} parent=0 // pred_region
    _
  $region17: #{transformer_encoder_layer.1} parent=0 // pred_fallthru
    _
  // Predicated region
  $region18: #{transformer_encoder_layer.1} parent=0 // pred_check
    _
  $region19: #{transformer_encoder_layer.1} parent=0 // pred_check_branch
    %22 = sbr.rel (0) target = $region21
  $region20: #{transformer_encoder_layer.1} parent=0 // pred_region
    _
  $region21: #{transformer_encoder_layer.1} parent=0 // pred_fallthru
    _
  // Predicated region
  $region22: #{transformer_encoder_layer.1} parent=0 // pred_check
    _
  $region23: #{transformer_encoder_layer.1} parent=0 // pred_check_branch
    %24 = sbr.rel (0) target = $region25
  $region24: #{transformer_encoder_layer.1} parent=0 // pred_region
    _
  $region25: #{transformer_encoder_layer.1} parent=0 // pred_fallthru
    _
  // Predicated region
  $region26: #{transformer_encoder_layer.1} parent=0 // pred_check
    _
  $region27: #{transformer_encoder_layer.1} parent=0 // pred_check_branch
    %26 = sbr.rel (0) target = $region29
  $region28: #{transformer_encoder_layer.1} parent=0 // pred_region
    _
  $region29: #{transformer_encoder_layer.1} parent=0 // pred_fallthru
    _
  // Predicated region
  $region30: #{transformer_encoder_layer.1} parent=0 // pred_check
    _
  $region31: #{transformer_encoder_layer.1} parent=0 // pred_check_branch
    %28 = sbr.rel (0) target = $region33
  $region32: #{transformer_encoder_layer.1} parent=0 // pred_region
    _
  $region33: #{transformer_encoder_layer.1} parent=0 // pred_fallthru
    _
  %v29 = vld [vmem:[%s0] sm:$0xff]
  %v30 = vld [vmem:[%s0 + $0x8] sm:$0xff]
  %v31 = vld [vmem:[%s1] sm:$0xff]
  %v32 = vld [vmem:[%s1 + $0x8] sm:$0xff]
  %v33 = vld [vmem:[%s7] sm:$0xff]
  %v34 = vld [vmem:[%s7 + $0x8] sm:$0x1]
  %v35 = vld [vmem:[%s2] sm:$0xff]
  %v36 = vld [vmem:[%s2 + $0x8] sm:$0xff]
  %v37 = vld [vmem:[%s2 + $0x10] sm:$0xff]
  %v38 = vld [vmem:[%s2 + $0x18] sm:$0xff]
  %v39 = vlaneseq
  %v40 = vshrl.u32 %v39, 7
  %v41 = vsub.s32 0, %v40
  %v42 = vrot.slane %v33, %v41
  %vm43 = vcmask 261120
  %v45 = vsel %vm43, %v29, 0
  %v48 = vsel %vm43, %v30, 0
  %50 = vmatprep.subr.mxu0 0.0
  %51 = vmatpush1.msra.mxu0 %v35
  %52 = vmatprep.subr.mxu0 0.0
  %53 = vmatpush1.msra.mxu0 %v36
  %54 = vmatprep.subr.mxu0 0.0
  %55 = vmatpush1.msra.mxu0 %v37
  %56 = vmatprep.subr.mxu0 0.0
  %57 = vmatpush1.msra.mxu0 %v38
  %58 = vmatprep.subr.mxu0 0.0
  %59 = vmatpush1.msra.mxu0 0.0
  %60 = vmatprep.subr.mxu0 0.0
  %61 = vmatpush1.msra.mxu0 0.0
  %62 = vmatprep.subr.mxu0 0.0
  %63 = vmatpush1.msra.mxu0 0.0
  %64 = vmatprep.subr.mxu0 0.0
  %65 = vmatpush1.msra.mxu0 0.0
  %66 = vmatprep.subr.mxu0 0.0
  %67 = vmatpush1.msra.mxu0 0.0
  %68 = vmatprep.subr.mxu0 0.0
  %69 = vmatpush1.msra.mxu0 0.0
  %70 = vmatprep.subr.mxu0 0.0
  %71 = vmatpush1.msra.mxu0 0.0
  %72 = vmatprep.subr.mxu0 0.0
  %73 = vmatpush1.msra.mxu0 0.0
  %74 = vmatprep.subr.mxu0 0.0
  %75 = vmatpush1.msra.mxu0 0.0
  %76 = vmatprep.subr.mxu0 0.0
  %77 = vmatpush1.msra.mxu0 0.0
  %78 = vmatprep.subr.mxu0 0.0
  %79 = vmatpush1.msra.mxu0 0.0
  %80 = vmatprep.subr.mxu0 0.0
  %81 = vmatpush1.msra.mxu0 0.0
  %82 = vmatprep.subr.mxu0 0.0
  %83 = vmatpush1.msra.mxu0 0.0
  %84 = vmatprep.subr.mxu0 0.0
  %85 = vmatpush1.msra.mxu0 0.0
  %86 = vmatprep.subr.mxu0 0.0
  %87 = vmatpush1.msra.mxu0 0.0
  %88 = vmatprep.subr.mxu0 0.0
  %89 = vmatpush1.msra.mxu0 0.0
  %90 = vmatprep.subr.mxu0 0.0
  %91 = vmatpush1.msra.mxu0 0.0
  %92 = vmatprep.subr.mxu0 0.0
  %93 = vmatpush1.msra.mxu0 0.0
  %94 = vmatprep.subr.mxu0 0.0
  %95 = vmatpush1.msra.mxu0 0.0
  %96 = vmatprep.subr.mxu0 0.0
  %97 = vmatpush1.msra.mxu0 0.0
  %98 = vmatprep.subr.mxu0 0.0
  %99 = vmatpush1.msra.mxu0 0.0
  %100 = vmatprep.subr.mxu0 0.0
  %101 = vmatpush1.msra.mxu0 0.0
  %102 = vmatprep.subr.mxu0 0.0
  %103 = vmatpush1.msra.mxu0 0.0
  %104 = vmatprep.subr.mxu0 0.0
  %105 = vmatpush1.msra.mxu0 0.0
  %106 = vmatprep.subr.mxu0 0.0
  %107 = vmatpush1.msra.mxu0 0.0
  %108 = vmatprep.subr.mxu0 0.0
  %109 = vmatpush1.msra.mxu0 0.0
  %110 = vmatprep.subr.mxu0 0.0
  %111 = vmatpush1.msra.mxu0 0.0
  %112 = vmatprep.subr.mxu0 0.0
  %113 = vmatpush1.msra.mxu0 0.0
  %114 = vmatprep.mubr.f32.mxu0 0.0
  %115 = vmatmul.mubr.f32.gmra.mrb[0].mxu0 %v45
  %v116 = vpop.f32.mrb[0].mxu0
  %v117 = vadd.f32 %v42, %v116
  %v118 = vpop.f32.mrb[0].mxu0
  %119 = vmatprep.mubr.f32.mxu0 0.0
  %120 = vmatmul.mubr.f32.gmra.mrb[0].mxu0 %v48
  %v121 = vpop.f32.mrb[0].mxu0
  %v122 = vadd.f32 %v42, %v121
  %v123 = vpop.f32.mrb[0].mxu0
  %124 = vdwg.mxu0
  %v125 = vld [vmem:[%s3] sm:$0xff]
  %v126 = vld [vmem:[%s3 + $0x8] sm:$0xff]
  %v127 = vld [vmem:[%s3 + $0x10] sm:$0xff]
  %v128 = vld [vmem:[%s3 + $0x18] sm:$0xff]
  %v129 = vld [vmem:[%s3 + $0x20] sm:$0xff]
  %v130 = vld [vmem:[%s3 + $0x28] sm:$0xff]
  %v131 = vlaneseq
  %v132 = vshrl.u32 %v131, 7
  %v133 = vsub.s32 1, %v132
  %v134 = vrot.slane %v33, %v133
  %vm135 = vcmask 392192
  %v137 = vsel %vm135, %v31, 0
  %v140 = vsel %vm135, %v32, 0
  %142 = vmatprep.subr.mxu0 0.0
  %143 = vmatpush1.msra.mxu0 %v125
  %144 = vmatprep.subr.mxu0 0.0
  %145 = vmatpush1.msra.mxu0 %v126
  %146 = vmatprep.subr.mxu0 0.0
  %147 = vmatpush1.msra.mxu0 %v127
  %148 = vmatprep.subr.mxu0 0.0
  %149 = vmatpush1.msra.mxu0 %v128
  %150 = vmatprep.subr.mxu0 0.0
  %151 = vmatpush1.msra.mxu0 %v129
  %152 = vmatprep.subr.mxu0 0.0
  %153 = vmatpush1.msra.mxu0 %v130
  %154 = vmatprep.subr.mxu0 0.0
  %155 = vmatpush1.msra.mxu0 0.0
  %156 = vmatprep.subr.mxu0 0.0
  %157 = vmatpush1.msra.mxu0 0.0
  %158 = vmatprep.subr.mxu0 0.0
  %159 = vmatpush1.msra.mxu0 0.0
  %160 = vmatprep.subr.mxu0 0.0
  %161 = vmatpush1.msra.mxu0 0.0
  %162 = vmatprep.subr.mxu0 0.0
  %163 = vmatpush1.msra.mxu0 0.0
  %164 = vmatprep.subr.mxu0 0.0
  %165 = vmatpush1.msra.mxu0 0.0
  %166 = vmatprep.subr.mxu0 0.0
  %167 = vmatpush1.msra.mxu0 0.0
  %168 = vmatprep.subr.mxu0 0.0
  %169 = vmatpush1.msra.mxu0 0.0
  %170 = vmatprep.subr.mxu0 0.0
  %171 = vmatpush1.msra.mxu0 0.0
  %172 = vmatprep.subr.mxu0 0.0
  %173 = vmatpush1.msra.mxu0 0.0
  %174 = vmatprep.subr.mxu0 0.0
  %175 = vmatpush1.msra.mxu0 0.0
  %176 = vmatprep.subr.mxu0 0.0
  %177 = vmatpush1.msra.mxu0 0.0
  %178 = vmatprep.subr.mxu0 0.0
  %179 = vmatpush1.msra.mxu0 0.0
  %180 = vmatprep.subr.mxu0 0.0
  %181 = vmatpush1.msra.mxu0 0.0
  %182 = vmatprep.subr.mxu0 0.0
  %183 = vmatpush1.msra.mxu0 0.0
  %184 = vmatprep.subr.mxu0 0.0
  %185 = vmatpush1.msra.mxu0 0.0
  %186 = vmatprep.subr.mxu0 0.0
  %187 = vmatpush1.msra.mxu0 0.0
  %188 = vmatprep.subr.mxu0 0.0
  %189 = vmatpush1.msra.mxu0 0.0
  %190 = vmatprep.subr.mxu0 0.0
  %191 = vmatpush1.msra.mxu0 0.0
  %192 = vmatprep.subr.mxu0 0.0
  %193 = vmatpush1.msra.mxu0 0.0
  %194 = vmatprep.subr.mxu0 0.0
  %195 = vmatpush1.msra.mxu0 0.0
  %196 = vmatprep.subr.mxu0 0.0
  %197 = vmatpush1.msra.mxu0 0.0
  %198 = vmatprep.subr.mxu0 0.0
  %199 = vmatpush1.msra.mxu0 0.0
  %200 = vmatprep.subr.mxu0 0.0
  %201 = vmatpush1.msra.mxu0 0.0
  %202 = vmatprep.subr.mxu0 0.0
  %203 = vmatpush1.msra.mxu0 0.0
  %204 = vmatprep.subr.mxu0 0.0
  %205 = vmatpush1.msra.mxu0 0.0
  %206 = vmatprep.mubr.f32.mxu0 0.0
  %207 = vmatmul.mubr.f32.gmra.mrb[0].mxu0 %v137
  %v208 = vpop.f32.mrb[0].mxu0
  %v209 = vadd.f32 %v134, %v208
  %v210 = vpop.f32.mrb[0].mxu0
  %211 = vmatprep.mubr.f32.mxu0 0.0
  %212 = vmatmul.mubr.f32.gmra.mrb[0].mxu0 %v140
  %v213 = vpop.f32.mrb[0].mxu0
  %v214 = vadd.f32 %v134, %v213
  %v215 = vpop.f32.mrb[0].mxu0
  %216 = vdwg.mxu0
  %v217 = vmul.f32 %v117, 0.35355338
  %v218 = vmul.f32 %v122, 0.35355338
  %vm219 = vcmask 64512
  %v221 = vsel %vm219, %v217, 0
  %v224 = vsel %vm219, %v209, 0
  %226 = vmatprep.subr.mxu0 0.0
  %227 = vmatpush1.xpose.msra.mxu0 %v224
  %228 = vmatprep.subr.mxu0 0.0
  %229 = vmatpush1.xpose.msra.mxu0 0.0
  %230 = vmatprep.subr.mxu0 0.0
  %231 = vmatpush1.xpose.msra.mxu0 0.0
  %232 = vmatprep.subr.mxu0 0.0
  %233 = vmatpush1.xpose.msra.mxu0 0.0
  %234 = vmatprep.subr.mxu0 0.0
  %235 = vmatpush1.xpose.msra.mxu0 0.0
  %236 = vmatprep.subr.mxu0 0.0
  %237 = vmatpush1.xpose.msra.mxu0 0.0
  %238 = vmatprep.subr.mxu0 0.0
  %239 = vmatpush1.xpose.msra.mxu0 0.0
  %240 = vmatprep.subr.mxu0 0.0
  %241 = vmatpush1.xpose.msra.mxu0 0.0
  %242 = vmatprep.subr.mxu0 0.0
  %243 = vmatpush1.xpose.msra.mxu0 0.0
  %244 = vmatprep.subr.mxu0 0.0
  %245 = vmatpush1.xpose.msra.mxu0 0.0
  %246 = vmatprep.subr.mxu0 0.0
  %247 = vmatpush1.xpose.msra.mxu0 0.0
  %248 = vmatprep.subr.mxu0 0.0
  %249 = vmatpush1.xpose.msra.mxu0 0.0
  %250 = vmatprep.subr.mxu0 0.0
  %251 = vmatpush1.xpose.msra.mxu0 0.0
  %252 = vmatprep.subr.mxu0 0.0
  %253 = vmatpush1.xpose.msra.mxu0 0.0
  %254 = vmatprep.subr.mxu0 0.0
  %255 = vmatpush1.xpose.msra.mxu0 0.0
  %256 = vmatprep.subr.mxu0 0.0
  %257 = vmatpush1.xpose.msra.mxu0 0.0
  %258 = vmatprep.subr.mxu0 0.0
  %259 = vmatpush1.xpose.msra.mxu0 0.0
  %260 = vmatprep.subr.mxu0 0.0
  %261 = vmatpush1.xpose.msra.mxu0 0.0
  %262 = vmatprep.subr.mxu0 0.0
  %263 = vmatpush1.xpose.msra.mxu0 0.0
  %264 = vmatprep.subr.mxu0 0.0
  %265 = vmatpush1.xpose.msra.mxu0 0.0
  %266 = vmatprep.subr.mxu0 0.0
  %267 = vmatpush1.xpose.msra.mxu0 0.0
  %268 = vmatprep.subr.mxu0 0.0
  %269 = vmatpush1.xpose.msra.mxu0 0.0
  %270 = vmatprep.subr.mxu0 0.0
  %271 = vmatpush1.xpose.msra.mxu0 0.0
  %272 = vmatprep.subr.mxu0 0.0
  %273 = vmatpush1.xpose.msra.mxu0 0.0
  %274 = vmatprep.subr.mxu0 0.0
  %275 = vmatpush1.xpose.msra.mxu0 0.0
  %276 = vmatprep.subr.mxu0 0.0
  %277 = vmatpush1.xpose.msra.mxu0 0.0
  %278 = vmatprep.subr.mxu0 0.0
  %279 = vmatpush1.xpose.msra.mxu0 0.0
  %280 = vmatprep.subr.mxu0 0.0
  %281 = vmatpush1.xpose.msra.mxu0 0.0
  %282 = vmatprep.subr.mxu0 0.0
  %283 = vmatpush1.xpose.msra.mxu0 0.0
  %284 = vmatprep.subr.mxu0 0.0
  %285 = vmatpush1.xpose.msra.mxu0 0.0
  %286 = vmatprep.subr.mxu0 0.0
  %287 = vmatpush1.xpose.msra.mxu0 0.0
  %288 = vmatprep.subr.mxu0 0.0
  %289 = vmatpush1.xpose.msra.mxu0 0.0
  %290 = vmatprep.mubr.f32.mxu0 0.0
  %291 = vmatmul.mubr.f32.gmra.mrb[0].mxu0 %v221
  %v292 = vpop.f32.mrb[0].mxu0
  %v293 = vadd.f32 0.0, %v292
  %v294 = vpop.f32.mrb[0].mxu0
  %295 = vdwg.mxu0
  %v297 = vsel %vm219, %v218, 0
  %v300 = vsel %vm219, %v214, 0
  %302 = vmatprep.subr.mxu0 0.0
  %303 = vmatpush1.xpose.msra.mxu0 %v300
  %304 = vmatprep.subr.mxu0 0.0
  %305 = vmatpush1.xpose.msra.mxu0 0.0
  %306 = vmatprep.subr.mxu0 0.0
  %307 = vmatpush1.xpose.msra.mxu0 0.0
  %308 = vmatprep.subr.mxu0 0.0
  %309 = vmatpush1.xpose.msra.mxu0 0.0
  %310 = vmatprep.subr.mxu0 0.0
  %311 = vmatpush1.xpose.msra.mxu0 0.0
  %312 = vmatprep.subr.mxu0 0.0
  %313 = vmatpush1.xpose.msra.mxu0 0.0
  %314 = vmatprep.subr.mxu0 0.0
  %315 = vmatpush1.xpose.msra.mxu0 0.0
  %316 = vmatprep.subr.mxu0 0.0
  %317 = vmatpush1.xpose.msra.mxu0 0.0
  %318 = vmatprep.subr.mxu0 0.0
  %319 = vmatpush1.xpose.msra.mxu0 0.0
  %320 = vmatprep.subr.mxu0 0.0
  %321 = vmatpush1.xpose.msra.mxu0 0.0
  %322 = vmatprep.subr.mxu0 0.0
  %323 = vmatpush1.xpose.msra.mxu0 0.0
  %324 = vmatprep.subr.mxu0 0.0
  %325 = vmatpush1.xpose.msra.mxu0 0.0
  %326 = vmatprep.subr.mxu0 0.0
  %327 = vmatpush1.xpose.msra.mxu0 0.0
  %328 = vmatprep.subr.mxu0 0.0
  %329 = vmatpush1.xpose.msra.mxu0 0.0
  %330 = vmatprep.subr.mxu0 0.0
  %331 = vmatpush1.xpose.msra.mxu0 0.0
  %332 = vmatprep.subr.mxu0 0.0
  %333 = vmatpush1.xpose.msra.mxu0 0.0
  %334 = vmatprep.subr.mxu0 0.0
  %335 = vmatpush1.xpose.msra.mxu0 0.0
  %336 = vmatprep.subr.mxu0 0.0
  %337 = vmatpush1.xpose.msra.mxu0 0.0
  %338 = vmatprep.subr.mxu0 0.0
  %339 = vmatpush1.xpose.msra.mxu0 0.0
  %340 = vmatprep.subr.mxu0 0.0
  %341 = vmatpush1.xpose.msra.mxu0 0.0
  %342 = vmatprep.subr.mxu0 0.0
  %343 = vmatpush1.xpose.msra.mxu0 0.0
  %344 = vmatprep.subr.mxu0 0.0
  %345 = vmatpush1.xpose.msra.mxu0 0.0
  %346 = vmatprep.subr.mxu0 0.0
  %347 = vmatpush1.xpose.msra.mxu0 0.0
  %348 = vmatprep.subr.mxu0 0.0
  %349 = vmatpush1.xpose.msra.mxu0 0.0
  %350 = vmatprep.subr.mxu0 0.0
  %351 = vmatpush1.xpose.msra.mxu0 0.0
  %352 = vmatprep.subr.mxu0 0.0
  %353 = vmatpush1.xpose.msra.mxu0 0.0
  %354 = vmatprep.subr.mxu0 0.0
  %355 = vmatpush1.xpose.msra.mxu0 0.0
  %356 = vmatprep.subr.mxu0 0.0
  %357 = vmatpush1.xpose.msra.mxu0 0.0
  %358 = vmatprep.subr.mxu0 0.0
  %359 = vmatpush1.xpose.msra.mxu0 0.0
  %360 = vmatprep.subr.mxu0 0.0
  %361 = vmatpush1.xpose.msra.mxu0 0.0
  %362 = vmatprep.subr.mxu0 0.0
  %363 = vmatpush1.xpose.msra.mxu0 0.0
  %364 = vmatprep.subr.mxu0 0.0
  %365 = vmatpush1.xpose.msra.mxu0 0.0
  %366 = vmatprep.mubr.f32.mxu0 0.0
  %367 = vmatmul.mubr.f32.gmra.mrb[0].mxu0 %v297
  %v368 = vpop.f32.mrb[0].mxu0
  %v369 = vadd.f32 0.0, %v368
  %v370 = vpop.f32.mrb[0].mxu0
  %371 = vdwg.mxu0
  %v372 = vsel %vm219, %v293, -inf
  %373 = vmax.xlane.f32.xlu0 %v372
  %v374 = vpop.xlane.xlu0 %373
  %v375 = vsel %vm219, %v369, -inf
  %376 = vmax.xlane.f32.xlu0 %v375
  %v377 = vpop.xlane.xlu0 %376
  %v378 = vsub.f32 %v293, %v374
  %v379 = vsub.f32 %v369, %v377
  %v380 = vmul.f32 %v378, 1.442695
  %v381 = vpow.pop %v380
  %v382 = vmul.f32 %v379, 1.442695
  %v383 = vpow.pop %v382
  %v384 = vsel %vm219, %v381, 0.0
  %385 = vadd.xlane.f32.xlu0 %v384
  %v386 = vpop.xlane.xlu0 %385
  %v387 = vsel %vm219, %v383, 0.0
  %388 = vadd.xlane.f32.xlu0 %v387
  %v389 = vpop.xlane.xlu0 %388
  %v390 = vrcp.pop %v386
  %v391 = vrcp.pop %v389
  %v392 = vmul.f32 %v381, %v390
  %v393 = vmul.f32 %v383, %v391
  %394 = vrot.lane.b32.xlu0 %v209, 96
  %v395 = vpop.permute.xlu0 %394
  %v398 = vsel %vm219, %v392, 0
  %400 = vmatprep.subr.mxu0 0.0
  %401 = vmatpush1.msra.mxu0 %v395
  %402 = vmatprep.subr.mxu0 0.0
  %403 = vmatpush1.msra.mxu0 0.0
  %404 = vmatprep.subr.mxu0 0.0
  %405 = vmatpush1.msra.mxu0 0.0
  %406 = vmatprep.subr.mxu0 0.0
  %407 = vmatpush1.msra.mxu0 0.0
  %408 = vmatprep.subr.mxu0 0.0
  %409 = vmatpush1.msra.mxu0 0.0
  %410 = vmatprep.subr.mxu0 0.0
  %411 = vmatpush1.msra.mxu0 0.0
  %412 = vmatprep.subr.mxu0 0.0
  %413 = vmatpush1.msra.mxu0 0.0
  %414 = vmatprep.subr.mxu0 0.0
  %415 = vmatpush1.msra.mxu0 0.0
  %416 = vmatprep.subr.mxu0 0.0
  %417 = vmatpush1.msra.mxu0 0.0
  %418 = vmatprep.subr.mxu0 0.0
  %419 = vmatpush1.msra.mxu0 0.0
  %420 = vmatprep.subr.mxu0 0.0
  %421 = vmatpush1.msra.mxu0 0.0
  %422 = vmatprep.subr.mxu0 0.0
  %423 = vmatpush1.msra.mxu0 0.0
  %424 = vmatprep.subr.mxu0 0.0
  %425 = vmatpush1.msra.mxu0 0.0
  %426 = vmatprep.subr.mxu0 0.0
  %427 = vmatpush1.msra.mxu0 0.0
  %428 = vmatprep.subr.mxu0 0.0
  %429 = vmatpush1.msra.mxu0 0.0
  %430 = vmatprep.subr.mxu0 0.0
  %431 = vmatpush1.msra.mxu0 0.0
  %432 = vmatprep.subr.mxu0 0.0
  %433 = vmatpush1.msra.mxu0 0.0
  %434 = vmatprep.subr.mxu0 0.0
  %435 = vmatpush1.msra.mxu0 0.0
  %436 = vmatprep.subr.mxu0 0.0
  %437 = vmatpush1.msra.mxu0 0.0
  %438 = vmatprep.subr.mxu0 0.0
  %439 = vmatpush1.msra.mxu0 0.0
  %440 = vmatprep.subr.mxu0 0.0
  %441 = vmatpush1.msra.mxu0 0.0
  %442 = vmatprep.subr.mxu0 0.0
  %443 = vmatpush1.msra.mxu0 0.0
  %444 = vmatprep.subr.mxu0 0.0
  %445 = vmatpush1.msra.mxu0 0.0
  %446 = vmatprep.subr.mxu0 0.0
  %447 = vmatpush1.msra.mxu0 0.0
  %448 = vmatprep.subr.mxu0 0.0
  %449 = vmatpush1.msra.mxu0 0.0
  %450 = vmatprep.subr.mxu0 0.0
  %451 = vmatpush1.msra.mxu0 0.0
  %452 = vmatprep.subr.mxu0 0.0
  %453 = vmatpush1.msra.mxu0 0.0
  %454 = vmatprep.subr.mxu0 0.0
  %455 = vmatpush1.msra.mxu0 0.0
  %456 = vmatprep.subr.mxu0 0.0
  %457 = vmatpush1.msra.mxu0 0.0
  %458 = vmatprep.subr.mxu0 0.0
  %459 = vmatpush1.msra.mxu0 0.0
  %460 = vmatprep.subr.mxu0 0.0
  %461 = vmatpush1.msra.mxu0 0.0
  %462 = vmatprep.subr.mxu0 0.0
  %463 = vmatpush1.msra.mxu0 0.0
  %464 = vmatprep.mubr.f32.mxu0 0.0
  %465 = vmatmul.mubr.f32.gmra.mrb[0].mxu0 %v398
  %v466 = vpop.f32.mrb[0].mxu0
  %v467 = vadd.f32 0.0, %v466
  %v468 = vpop.f32.mrb[0].mxu0
  %469 = vdwg.mxu0
  %470 = vrot.lane.b32.xlu0 %v214, 96
  %v471 = vpop.permute.xlu0 %470
  %v474 = vsel %vm219, %v393, 0
  %476 = vmatprep.subr.mxu0 0.0
  %477 = vmatpush1.msra.mxu0 %v471
  %478 = vmatprep.subr.mxu0 0.0
  %479 = vmatpush1.msra.mxu0 0.0
  %480 = vmatprep.subr.mxu0 0.0
  %481 = vmatpush1.msra.mxu0 0.0
  %482 = vmatprep.subr.mxu0 0.0
  %483 = vmatpush1.msra.mxu0 0.0
  %484 = vmatprep.subr.mxu0 0.0
  %485 = vmatpush1.msra.mxu0 0.0
  %486 = vmatprep.subr.mxu0 0.0
  %487 = vmatpush1.msra.mxu0 0.0
  %488 = vmatprep.subr.mxu0 0.0
  %489 = vmatpush1.msra.mxu0 0.0
  %490 = vmatprep.subr.mxu0 0.0
  %491 = vmatpush1.msra.mxu0 0.0
  %492 = vmatprep.subr.mxu0 0.0
  %493 = vmatpush1.msra.mxu0 0.0
  %494 = vmatprep.subr.mxu0 0.0
  %495 = vmatpush1.msra.mxu0 0.0
  %496 = vmatprep.subr.mxu0 0.0
  %497 = vmatpush1.msra.mxu0 0.0
  %498 = vmatprep.subr.mxu0 0.0
  %499 = vmatpush1.msra.mxu0 0.0
  %500 = vmatprep.subr.mxu0 0.0
  %501 = vmatpush1.msra.mxu0 0.0
  %502 = vmatprep.subr.mxu0 0.0
  %503 = vmatpush1.msra.mxu0 0.0
  %504 = vmatprep.subr.mxu0 0.0
  %505 = vmatpush1.msra.mxu0 0.0
  %506 = vmatprep.subr.mxu0 0.0
  %507 = vmatpush1.msra.mxu0 0.0
  %508 = vmatprep.subr.mxu0 0.0
  %509 = vmatpush1.msra.mxu0 0.0
  %510 = vmatprep.subr.mxu0 0.0
  %511 = vmatpush1.msra.mxu0 0.0
  %512 = vmatprep.subr.mxu0 0.0
  %513 = vmatpush1.msra.mxu0 0.0
  %514 = vmatprep.subr.mxu0 0.0
  %515 = vmatpush1.msra.mxu0 0.0
  %516 = vmatprep.subr.mxu0 0.0
  %517 = vmatpush1.msra.mxu0 0.0
  %518 = vmatprep.subr.mxu0 0.0
  %519 = vmatpush1.msra.mxu0 0.0
  %520 = vmatprep.subr.mxu0 0.0
  %521 = vmatpush1.msra.mxu0 0.0
  %522 = vmatprep.subr.mxu0 0.0
  %523 = vmatpush1.msra.mxu0 0.0
  %524 = vmatprep.subr.mxu0 0.0
  %525 = vmatpush1.msra.mxu0 0.0
  %526 = vmatprep.subr.mxu0 0.0
  %527 = vmatpush1.msra.mxu0 0.0
  %528 = vmatprep.subr.mxu0 0.0
  %529 = vmatpush1.msra.mxu0 0.0
  %530 = vmatprep.subr.mxu0 0.0
  %531 = vmatpush1.msra.mxu0 0.0
  %532 = vmatprep.subr.mxu0 0.0
  %533 = vmatpush1.msra.mxu0 0.0
  %534 = vmatprep.subr.mxu0 0.0
  %535 = vmatpush1.msra.mxu0 0.0
  %536 = vmatprep.subr.mxu0 0.0
  %537 = vmatpush1.msra.mxu0 0.0
  %538 = vmatprep.subr.mxu0 0.0
  %539 = vmatpush1.msra.mxu0 0.0
  %540 = vmatprep.mubr.f32.mxu0 0.0
  %541 = vmatmul.mubr.f32.gmra.mrb[0].mxu0 %v474
  %v542 = vpop.f32.mrb[0].mxu0
  %v543 = vadd.f32 0.0, %v542
  %v544 = vpop.f32.mrb[0].mxu0
  %545 = vdwg.mxu0
  %546 = vrot.lane.b32.xlu0 %v217, 120
  %v547 = vpop.permute.xlu0 %546
  %548 = vrot.lane.b32.xlu0 %v209, 120
  %v549 = vpop.permute.xlu0 %548
  %v550 = vsel %vm219, %v547, 0
  %v552 = vsel %vm219, %v549, 0
  %554 = vmatprep.subr.mxu0 0.0
  %555 = vmatpush1.xpose.msra.mxu0 %v552
  %556 = vmatprep.subr.mxu0 0.0
  %557 = vmatpush1.xpose.msra.mxu0 0.0
  %558 = vmatprep.subr.mxu0 0.0
  %559 = vmatpush1.xpose.msra.mxu0 0.0
  %560 = vmatprep.subr.mxu0 0.0
  %561 = vmatpush1.xpose.msra.mxu0 0.0
  %562 = vmatprep.subr.mxu0 0.0
  %563 = vmatpush1.xpose.msra.mxu0 0.0
  %564 = vmatprep.subr.mxu0 0.0
  %565 = vmatpush1.xpose.msra.mxu0 0.0
  %566 = vmatprep.subr.mxu0 0.0
  %567 = vmatpush1.xpose.msra.mxu0 0.0
  %568 = vmatprep.subr.mxu0 0.0
  %569 = vmatpush1.xpose.msra.mxu0 0.0
  %570 = vmatprep.subr.mxu0 0.0
  %571 = vmatpush1.xpose.msra.mxu0 0.0
  %572 = vmatprep.subr.mxu0 0.0
  %573 = vmatpush1.xpose.msra.mxu0 0.0
  %574 = vmatprep.subr.mxu0 0.0
  %575 = vmatpush1.xpose.msra.mxu0 0.0
  %576 = vmatprep.subr.mxu0 0.0
  %577 = vmatpush1.xpose.msra.mxu0 0.0
  %578 = vmatprep.subr.mxu0 0.0
  %579 = vmatpush1.xpose.msra.mxu0 0.0
  %580 = vmatprep.subr.mxu0 0.0
  %581 = vmatpush1.xpose.msra.mxu0 0.0
  %582 = vmatprep.subr.mxu0 0.0
  %583 = vmatpush1.xpose.msra.mxu0 0.0
  %584 = vmatprep.subr.mxu0 0.0
  %585 = vmatpush1.xpose.msra.mxu0 0.0
  %586 = vmatprep.subr.mxu0 0.0
  %587 = vmatpush1.xpose.msra.mxu0 0.0
  %588 = vmatprep.subr.mxu0 0.0
  %589 = vmatpush1.xpose.msra.mxu0 0.0
  %590 = vmatprep.subr.mxu0 0.0
  %591 = vmatpush1.xpose.msra.mxu0 0.0
  %592 = vmatprep.subr.mxu0 0.0
  %593 = vmatpush1.xpose.msra.mxu0 0.0
  %594 = vmatprep.subr.mxu0 0.0
  %595 = vmatpush1.xpose.msra.mxu0 0.0
  %596 = vmatprep.subr.mxu0 0.0
  %597 = vmatpush1.xpose.msra.mxu0 0.0
  %598 = vmatprep.subr.mxu0 0.0
  %599 = vmatpush1.xpose.msra.mxu0 0.0
  %600 = vmatprep.subr.mxu0 0.0
  %601 = vmatpush1.xpose.msra.mxu0 0.0
  %602 = vmatprep.subr.mxu0 0.0
  %603 = vmatpush1.xpose.msra.mxu0 0.0
  %604 = vmatprep.subr.mxu0 0.0
  %605 = vmatpush1.xpose.msra.mxu0 0.0
  %606 = vmatprep.subr.mxu0 0.0
  %607 = vmatpush1.xpose.msra.mxu0 0.0
  %608 = vmatprep.subr.mxu0 0.0
  %609 = vmatpush1.xpose.msra.mxu0 0.0
  %610 = vmatprep.subr.mxu0 0.0
  %611 = vmatpush1.xpose.msra.mxu0 0.0
  %612 = vmatprep.subr.mxu0 0.0
  %613 = vmatpush1.xpose.msra.mxu0 0.0
  %614 = vmatprep.subr.mxu0 0.0
  %615 = vmatpush1.xpose.msra.mxu0 0.0
  %616 = vmatprep.subr.mxu0 0.0
  %617 = vmatpush1.xpose.msra.mxu0 0.0
  %618 = vmatprep.mubr.f32.mxu0 0.0
  %619 = vmatmul.mubr.f32.gmra.mrb[0].mxu0 %v550
  %v620 = vpop.f32.mrb[0].mxu0
  %v621 = vadd.f32 0.0, %v620
  %v622 = vpop.f32.mrb[0].mxu0
  %623 = vdwg.mxu0
  %624 = vrot.lane.b32.xlu0 %v218, 120
  %v625 = vpop.permute.xlu0 %624
  %626 = vrot.lane.b32.xlu0 %v214, 120
  %v627 = vpop.permute.xlu0 %626
  %v628 = vsel %vm219, %v625, 0
  %v630 = vsel %vm219, %v627, 0
  %632 = vmatprep.subr.mxu0 0.0
  %633 = vmatpush1.xpose.msra.mxu0 %v630
  %634 = vmatprep.subr.mxu0 0.0
  %635 = vmatpush1.xpose.msra.mxu0 0.0
  %636 = vmatprep.subr.mxu0 0.0
  %637 = vmatpush1.xpose.msra.mxu0 0.0
  %638 = vmatprep.subr.mxu0 0.0
  %639 = vmatpush1.xpose.msra.mxu0 0.0
  %640 = vmatprep.subr.mxu0 0.0
  %641 = vmatpush1.xpose.msra.mxu0 0.0
  %642 = vmatprep.subr.mxu0 0.0
  %643 = vmatpush1.xpose.msra.mxu0 0.0
  %644 = vmatprep.subr.mxu0 0.0
  %645 = vmatpush1.xpose.msra.mxu0 0.0
  %646 = vmatprep.subr.mxu0 0.0
  %647 = vmatpush1.xpose.msra.mxu0 0.0
  %648 = vmatprep.subr.mxu0 0.0
  %649 = vmatpush1.xpose.msra.mxu0 0.0
  %650 = vmatprep.subr.mxu0 0.0
  %651 = vmatpush1.xpose.msra.mxu0 0.0
  %652 = vmatprep.subr.mxu0 0.0
  %653 = vmatpush1.xpose.msra.mxu0 0.0
  %654 = vmatprep.subr.mxu0 0.0
  %655 = vmatpush1.xpose.msra.mxu0 0.0
  %656 = vmatprep.subr.mxu0 0.0
  %657 = vmatpush1.xpose.msra.mxu0 0.0
  %658 = vmatprep.subr.mxu0 0.0
  %659 = vmatpush1.xpose.msra.mxu0 0.0
  %660 = vmatprep.subr.mxu0 0.0
  %661 = vmatpush1.xpose.msra.mxu0 0.0
  %662 = vmatprep.subr.mxu0 0.0
  %663 = vmatpush1.xpose.msra.mxu0 0.0
  %664 = vmatprep.subr.mxu0 0.0
  %665 = vmatpush1.xpose.msra.mxu0 0.0
  %666 = vmatprep.subr.mxu0 0.0
  %667 = vmatpush1.xpose.msra.mxu0 0.0
  %668 = vmatprep.subr.mxu0 0.0
  %669 = vmatpush1.xpose.msra.mxu0 0.0
  %670 = vmatprep.subr.mxu0 0.0
  %671 = vmatpush1.xpose.msra.mxu0 0.0
  %672 = vmatprep.subr.mxu0 0.0
  %673 = vmatpush1.xpose.msra.mxu0 0.0
  %674 = vmatprep.subr.mxu0 0.0
  %675 = vmatpush1.xpose.msra.mxu0 0.0
  %676 = vmatprep.subr.mxu0 0.0
  %677 = vmatpush1.xpose.msra.mxu0 0.0
  %678 = vmatprep.subr.mxu0 0.0
  %679 = vmatpush1.xpose.msra.mxu0 0.0
  %680 = vmatprep.subr.mxu0 0.0
  %681 = vmatpush1.xpose.msra.mxu0 0.0
  %682 = vmatprep.subr.mxu0 0.0
  %683 = vmatpush1.xpose.msra.mxu0 0.0
  %684 = vmatprep.subr.mxu0 0.0
  %685 = vmatpush1.xpose.msra.mxu0 0.0
  %686 = vmatprep.subr.mxu0 0.0
  %687 = vmatpush1.xpose.msra.mxu0 0.0
  %688 = vmatprep.subr.mxu0 0.0
  %689 = vmatpush1.xpose.msra.mxu0 0.0
  %690 = vmatprep.subr.mxu0 0.0
  %691 = vmatpush1.xpose.msra.mxu0 0.0
  %692 = vmatprep.subr.mxu0 0.0
  %693 = vmatpush1.xpose.msra.mxu0 0.0
  %694 = vmatprep.subr.mxu0 0.0
  %695 = vmatpush1.xpose.msra.mxu0 0.0
  %696 = vmatprep.mubr.f32.mxu0 0.0
  %697 = vmatmul.mubr.f32.gmra.mrb[0].mxu0 %v628
  %v698 = vpop.f32.mrb[0].mxu0
  %v699 = vadd.f32 0.0, %v698
  %v700 = vpop.f32.mrb[0].mxu0
  %701 = vdwg.mxu0
  %v702 = vsel %vm219, %v621, -inf
  %703 = vmax.xlane.f32.xlu0 %v702
  %v704 = vpop.xlane.xlu0 %703
  %v705 = vsel %vm219, %v699, -inf
  %706 = vmax.xlane.f32.xlu0 %v705
  %v707 = vpop.xlane.xlu0 %706
  %v708 = vsub.f32 %v621, %v704
  %v709 = vsub.f32 %v699, %v707
  %v710 = vmul.f32 %v708, 1.442695
  %v711 = vpow.pop %v710
  %v712 = vmul.f32 %v709, 1.442695
  %v713 = vpow.pop %v712
  %v714 = vsel %vm219, %v711, 0.0
  %715 = vadd.xlane.f32.xlu0 %v714
  %v716 = vpop.xlane.xlu0 %715
  %v717 = vsel %vm219, %v713, 0.0
  %718 = vadd.xlane.f32.xlu0 %v717
  %v719 = vpop.xlane.xlu0 %718
  %v720 = vrcp.pop %v716
  %v721 = vrcp.pop %v719
  %v722 = vmul.f32 %v711, %v720
  %v723 = vmul.f32 %v713, %v721
  %724 = vrot.lane.b32.xlu0 %v209, 88
  %v725 = vpop.permute.xlu0 %724
  %v728 = vsel %vm219, %v722, 0
  %730 = vmatprep.subr.mxu0 0.0
  %731 = vmatpush1.msra.mxu0 %v725
  %732 = vmatprep.subr.mxu0 0.0
  %733 = vmatpush1.msra.mxu0 0.0
  %734 = vmatprep.subr.mxu0 0.0
  %735 = vmatpush1.msra.mxu0 0.0
  %736 = vmatprep.subr.mxu0 0.0
  %737 = vmatpush1.msra.mxu0 0.0
  %738 = vmatprep.subr.mxu0 0.0
  %739 = vmatpush1.msra.mxu0 0.0
  %740 = vmatprep.subr.mxu0 0.0
  %741 = vmatpush1.msra.mxu0 0.0
  %742 = vmatprep.subr.mxu0 0.0
  %743 = vmatpush1.msra.mxu0 0.0
  %744 = vmatprep.subr.mxu0 0.0
  %745 = vmatpush1.msra.mxu0 0.0
  %746 = vmatprep.subr.mxu0 0.0
  %747 = vmatpush1.msra.mxu0 0.0
  %748 = vmatprep.subr.mxu0 0.0
  %749 = vmatpush1.msra.mxu0 0.0
  %750 = vmatprep.subr.mxu0 0.0
  %751 = vmatpush1.msra.mxu0 0.0
  %752 = vmatprep.subr.mxu0 0.0
  %753 = vmatpush1.msra.mxu0 0.0
  %754 = vmatprep.subr.mxu0 0.0
  %755 = vmatpush1.msra.mxu0 0.0
  %756 = vmatprep.subr.mxu0 0.0
  %757 = vmatpush1.msra.mxu0 0.0
  %758 = vmatprep.subr.mxu0 0.0
  %759 = vmatpush1.msra.mxu0 0.0
  %760 = vmatprep.subr.mxu0 0.0
  %761 = vmatpush1.msra.mxu0 0.0
  %762 = vmatprep.subr.mxu0 0.0
  %763 = vmatpush1.msra.mxu0 0.0
  %764 = vmatprep.subr.mxu0 0.0
  %765 = vmatpush1.msra.mxu0 0.0
  %766 = vmatprep.subr.mxu0 0.0
  %767 = vmatpush1.msra.mxu0 0.0
  %768 = vmatprep.subr.mxu0 0.0
  %769 = vmatpush1.msra.mxu0 0.0
  %770 = vmatprep.subr.mxu0 0.0
  %771 = vmatpush1.msra.mxu0 0.0
  %772 = vmatprep.subr.mxu0 0.0
  %773 = vmatpush1.msra.mxu0 0.0
  %774 = vmatprep.subr.mxu0 0.0
  %775 = vmatpush1.msra.mxu0 0.0
  %776 = vmatprep.subr.mxu0 0.0
  %777 = vmatpush1.msra.mxu0 0.0
  %778 = vmatprep.subr.mxu0 0.0
  %779 = vmatpush1.msra.mxu0 0.0
  %780 = vmatprep.subr.mxu0 0.0
  %781 = vmatpush1.msra.mxu0 0.0
  %782 = vmatprep.subr.mxu0 0.0
  %783 = vmatpush1.msra.mxu0 0.0
  %784 = vmatprep.subr.mxu0 0.0
  %785 = vmatpush1.msra.mxu0 0.0
  %786 = vmatprep.subr.mxu0 0.0
  %787 = vmatpush1.msra.mxu0 0.0
  %788 = vmatprep.subr.mxu0 0.0
  %789 = vmatpush1.msra.mxu0 0.0
  %790 = vmatprep.subr.mxu0 0.0
  %791 = vmatpush1.msra.mxu0 0.0
  %792 = vmatprep.subr.mxu0 0.0
  %793 = vmatpush1.msra.mxu0 0.0
  %794 = vmatprep.mubr.f32.mxu0 0.0
  %795 = vmatmul.mubr.f32.gmra.mrb[0].mxu0 %v728
  %v796 = vpop.f32.mrb[0].mxu0
  %v797 = vadd.f32 0.0, %v796
  %v798 = vpop.f32.mrb[0].mxu0
  %799 = vdwg.mxu0
  %800 = vrot.lane.b32.xlu0 %v214, 88
  %v801 = vpop.permute.xlu0 %800
  %v804 = vsel %vm219, %v723, 0
  %806 = vmatprep.subr.mxu0 0.0
  %807 = vmatpush1.msra.mxu0 %v801
  %808 = vmatprep.subr.mxu0 0.0
  %809 = vmatpush1.msra.mxu0 0.0
  %810 = vmatprep.subr.mxu0 0.0
  %811 = vmatpush1.msra.mxu0 0.0
  %812 = vmatprep.subr.mxu0 0.0
  %813 = vmatpush1.msra.mxu0 0.0
  %814 = vmatprep.subr.mxu0 0.0
  %815 = vmatpush1.msra.mxu0 0.0
  %816 = vmatprep.subr.mxu0 0.0
  %817 = vmatpush1.msra.mxu0 0.0
  %818 = vmatprep.subr.mxu0 0.0
  %819 = vmatpush1.msra.mxu0 0.0
  %820 = vmatprep.subr.mxu0 0.0
  %821 = vmatpush1.msra.mxu0 0.0
  %822 = vmatprep.subr.mxu0 0.0
  %823 = vmatpush1.msra.mxu0 0.0
  %824 = vmatprep.subr.mxu0 0.0
  %825 = vmatpush1.msra.mxu0 0.0
  %826 = vmatprep.subr.mxu0 0.0
  %827 = vmatpush1.msra.mxu0 0.0
  %828 = vmatprep.subr.mxu0 0.0
  %829 = vmatpush1.msra.mxu0 0.0
  %830 = vmatprep.subr.mxu0 0.0
  %831 = vmatpush1.msra.mxu0 0.0
  %832 = vmatprep.subr.mxu0 0.0
  %833 = vmatpush1.msra.mxu0 0.0
  %834 = vmatprep.subr.mxu0 0.0
  %835 = vmatpush1.msra.mxu0 0.0
  %836 = vmatprep.subr.mxu0 0.0
  %837 = vmatpush1.msra.mxu0 0.0
  %838 = vmatprep.subr.mxu0 0.0
  %839 = vmatpush1.msra.mxu0 0.0
  %840 = vmatprep.subr.mxu0 0.0
  %841 = vmatpush1.msra.mxu0 0.0
  %842 = vmatprep.subr.mxu0 0.0
  %843 = vmatpush1.msra.mxu0 0.0
  %844 = vmatprep.subr.mxu0 0.0
  %845 = vmatpush1.msra.mxu0 0.0
  %846 = vmatprep.subr.mxu0 0.0
  %847 = vmatpush1.msra.mxu0 0.0
  %848 = vmatprep.subr.mxu0 0.0
  %849 = vmatpush1.msra.mxu0 0.0
  %850 = vmatprep.subr.mxu0 0.0
  %851 = vmatpush1.msra.mxu0 0.0
  %852 = vmatprep.subr.mxu0 0.0
  %853 = vmatpush1.msra.mxu0 0.0
  %854 = vmatprep.subr.mxu0 0.0
  %855 = vmatpush1.msra.mxu0 0.0
  %856 = vmatprep.subr.mxu0 0.0
  %857 = vmatpush1.msra.mxu0 0.0
  %858 = vmatprep.subr.mxu0 0.0
  %859 = vmatpush1.msra.mxu0 0.0
  %860 = vmatprep.subr.mxu0 0.0
  %861 = vmatpush1.msra.mxu0 0.0
  %862 = vmatprep.subr.mxu0 0.0
  %863 = vmatpush1.msra.mxu0 0.0
  %864 = vmatprep.subr.mxu0 0.0
  %865 = vmatpush1.msra.mxu0 0.0
  %866 = vmatprep.subr.mxu0 0.0
  %867 = vmatpush1.msra.mxu0 0.0
  %868 = vmatprep.subr.mxu0 0.0
  %869 = vmatpush1.msra.mxu0 0.0
  %870 = vmatprep.mubr.f32.mxu0 0.0
  %871 = vmatmul.mubr.f32.gmra.mrb[0].mxu0 %v804
  %v872 = vpop.f32.mrb[0].mxu0
  %v873 = vadd.f32 0.0, %v872
  %v874 = vpop.f32.mrb[0].mxu0
  %875 = vdwg.mxu0
  %876 = vrot.lane.b32.xlu0 %v217, 112
  %v877 = vpop.permute.xlu0 %876
  %878 = vrot.lane.b32.xlu0 %v209, 112
  %v879 = vpop.permute.xlu0 %878
  %v880 = vsel %vm219, %v877, 0
  %v882 = vsel %vm219, %v879, 0
  %884 = vmatprep.subr.mxu0 0.0
  %885 = vmatpush1.xpose.msra.mxu0 %v882
  %886 = vmatprep.subr.mxu0 0.0
  %887 = vmatpush1.xpose.msra.mxu0 0.0
  %888 = vmatprep.subr.mxu0 0.0
  %889 = vmatpush1.xpose.msra.mxu0 0.0
  %890 = vmatprep.subr.mxu0 0.0
  %891 = vmatpush1.xpose.msra.mxu0 0.0
  %892 = vmatprep.subr.mxu0 0.0
  %893 = vmatpush1.xpose.msra.mxu0 0.0
  %894 = vmatprep.subr.mxu0 0.0
  %895 = vmatpush1.xpose.msra.mxu0 0.0
  %896 = vmatprep.subr.mxu0 0.0
  %897 = vmatpush1.xpose.msra.mxu0 0.0
  %898 = vmatprep.subr.mxu0 0.0
  %899 = vmatpush1.xpose.msra.mxu0 0.0
  %900 = vmatprep.subr.mxu0 0.0
  %901 = vmatpush1.xpose.msra.mxu0 0.0
  %902 = vmatprep.subr.mxu0 0.0
  %903 = vmatpush1.xpose.msra.mxu0 0.0
  %904 = vmatprep.subr.mxu0 0.0
  %905 = vmatpush1.xpose.msra.mxu0 0.0
  %906 = vmatprep.subr.mxu0 0.0
  %907 = vmatpush1.xpose.msra.mxu0 0.0
  %908 = vmatprep.subr.mxu0 0.0
  %909 = vmatpush1.xpose.msra.mxu0 0.0
  %910 = vmatprep.subr.mxu0 0.0
  %911 = vmatpush1.xpose.msra.mxu0 0.0
  %912 = vmatprep.subr.mxu0 0.0
  %913 = vmatpush1.xpose.msra.mxu0 0.0
  %914 = vmatprep.subr.mxu0 0.0
  %915 = vmatpush1.xpose.msra.mxu0 0.0
  %916 = vmatprep.subr.mxu0 0.0
  %917 = vmatpush1.xpose.msra.mxu0 0.0
  %918 = vmatprep.subr.mxu0 0.0
  %919 = vmatpush1.xpose.msra.mxu0 0.0
  %920 = vmatprep.subr.mxu0 0.0
  %921 = vmatpush1.xpose.msra.mxu0 0.0
  %922 = vmatprep.subr.mxu0 0.0
  %923 = vmatpush1.xpose.msra.mxu0 0.0
  %924 = vmatprep.subr.mxu0 0.0
  %925 = vmatpush1.xpose.msra.mxu0 0.0
  %926 = vmatprep.subr.mxu0 0.0
  %927 = vmatpush1.xpose.msra.mxu0 0.0
  %928 = vmatprep.subr.mxu0 0.0
  %929 = vmatpush1.xpose.msra.mxu0 0.0
  %930 = vmatprep.subr.mxu0 0.0
  %931 = vmatpush1.xpose.msra.mxu0 0.0
  %932 = vmatprep.subr.mxu0 0.0
  %933 = vmatpush1.xpose.msra.mxu0 0.0
  %934 = vmatprep.subr.mxu0 0.0
  %935 = vmatpush1.xpose.msra.mxu0 0.0
  %936 = vmatprep.subr.mxu0 0.0
  %937 = vmatpush1.xpose.msra.mxu0 0.0
  %938 = vmatprep.subr.mxu0 0.0
  %939 = vmatpush1.xpose.msra.mxu0 0.0
  %940 = vmatprep.subr.mxu0 0.0
  %941 = vmatpush1.xpose.msra.mxu0 0.0
  %942 = vmatprep.subr.mxu0 0.0
  %943 = vmatpush1.xpose.msra.mxu0 0.0
  %944 = vmatprep.subr.mxu0 0.0
  %945 = vmatpush1.xpose.msra.mxu0 0.0
  %946 = vmatprep.subr.mxu0 0.0
  %947 = vmatpush1.xpose.msra.mxu0 0.0
  %948 = vmatprep.mubr.f32.mxu0 0.0
  %949 = vmatmul.mubr.f32.gmra.mrb[0].mxu0 %v880
  %v950 = vpop.f32.mrb[0].mxu0
  %v951 = vadd.f32 0.0, %v950
  %v952 = vpop.f32.mrb[0].mxu0
  %953 = vdwg.mxu0
  %954 = vrot.lane.b32.xlu0 %v218, 112
  %v955 = vpop.permute.xlu0 %954
  %956 = vrot.lane.b32.xlu0 %v214, 112
  %v957 = vpop.permute.xlu0 %956
  %v958 = vsel %vm219, %v955, 0
  %v960 = vsel %vm219, %v957, 0
  %962 = vmatprep.subr.mxu0 0.0
  %963 = vmatpush1.xpose.msra.mxu0 %v960
  %964 = vmatprep.subr.mxu0 0.0
  %965 = vmatpush1.xpose.msra.mxu0 0.0
  %966 = vmatprep.subr.mxu0 0.0
  %967 = vmatpush1.xpose.msra.mxu0 0.0
  %968 = vmatprep.subr.mxu0 0.0
  %969 = vmatpush1.xpose.msra.mxu0 0.0
  %970 = vmatprep.subr.mxu0 0.0
  %971 = vmatpush1.xpose.msra.mxu0 0.0
  %972 = vmatprep.subr.mxu0 0.0
  %973 = vmatpush1.xpose.msra.mxu0 0.0
  %974 = vmatprep.subr.mxu0 0.0
  %975 = vmatpush1.xpose.msra.mxu0 0.0
  %976 = vmatprep.subr.mxu0 0.0
  %977 = vmatpush1.xpose.msra.mxu0 0.0
  %978 = vmatprep.subr.mxu0 0.0
  %979 = vmatpush1.xpose.msra.mxu0 0.0
  %980 = vmatprep.subr.mxu0 0.0
  %981 = vmatpush1.xpose.msra.mxu0 0.0
  %982 = vmatprep.subr.mxu0 0.0
  %983 = vmatpush1.xpose.msra.mxu0 0.0
  %984 = vmatprep.subr.mxu0 0.0
  %985 = vmatpush1.xpose.msra.mxu0 0.0
  %986 = vmatprep.subr.mxu0 0.0
  %987 = vmatpush1.xpose.msra.mxu0 0.0
  %988 = vmatprep.subr.mxu0 0.0
  %989 = vmatpush1.xpose.msra.mxu0 0.0
  %990 = vmatprep.subr.mxu0 0.0
  %991 = vmatpush1.xpose.msra.mxu0 0.0
  %992 = vmatprep.subr.mxu0 0.0
  %993 = vmatpush1.xpose.msra.mxu0 0.0
  %994 = vmatprep.subr.mxu0 0.0
  %995 = vmatpush1.xpose.msra.mxu0 0.0
  %996 = vmatprep.subr.mxu0 0.0
  %997 = vmatpush1.xpose.msra.mxu0 0.0
  %998 = vmatprep.subr.mxu0 0.0
  %999 = vmatpush1.xpose.msra.mxu0 0.0
  %1000 = vmatprep.subr.mxu0 0.0
  %1001 = vmatpush1.xpose.msra.mxu0 0.0
  %1002 = vmatprep.subr.mxu0 0.0
  %1003 = vmatpush1.xpose.msra.mxu0 0.0
  %1004 = vmatprep.subr.mxu0 0.0
  %1005 = vmatpush1.xpose.msra.mxu0 0.0
  %1006 = vmatprep.subr.mxu0 0.0
  %1007 = vmatpush1.xpose.msra.mxu0 0.0
  %1008 = vmatprep.subr.mxu0 0.0
  %1009 = vmatpush1.xpose.msra.mxu0 0.0
  %1010 = vmatprep.subr.mxu0 0.0
  %1011 = vmatpush1.xpose.msra.mxu0 0.0
  %1012 = vmatprep.subr.mxu0 0.0
  %1013 = vmatpush1.xpose.msra.mxu0 0.0
  %1014 = vmatprep.subr.mxu0 0.0
  %1015 = vmatpush1.xpose.msra.mxu0 0.0
  %1016 = vmatprep.subr.mxu0 0.0
  %1017 = vmatpush1.xpose.msra.mxu0 0.0
  %1018 = vmatprep.subr.mxu0 0.0
  %1019 = vmatpush1.xpose.msra.mxu0 0.0
  %1020 = vmatprep.subr.mxu0 0.0
  %1021 = vmatpush1.xpose.msra.mxu0 0.0
  %1022 = vmatprep.subr.mxu0 0.0
  %1023 = vmatpush1.xpose.msra.mxu0 0.0
  %1024 = vmatprep.subr.mxu0 0.0
  %1025 = vmatpush1.xpose.msra.mxu0 0.0
  %1026 = vmatprep.mubr.f32.mxu0 0.0
  %1027 = vmatmul.mubr.f32.gmra.mrb[0].mxu0 %v958
  %v1028 = vpop.f32.mrb[0].mxu0
  %v1029 = vadd.f32 0.0, %v1028
  %v1030 = vpop.f32.mrb[0].mxu0
  %1031 = vdwg.mxu0
  %v1032 = vsel %vm219, %v951, -inf
  %1033 = vmax.xlane.f32.xlu0 %v1032
  %v1034 = vpop.xlane.xlu0 %1033
  %v1035 = vsel %vm219, %v1029, -inf
  %1036 = vmax.xlane.f32.xlu0 %v1035
  %v1037 = vpop.xlane.xlu0 %1036
  %v1038 = vsub.f32 %v951, %v1034
  %v1039 = vsub.f32 %v1029, %v1037
  %v1040 = vmul.f32 %v1038, 1.442695
  %v1041 = vpow.pop %v1040
  %v1042 = vmul.f32 %v1039, 1.442695
  %v1043 = vpow.pop %v1042
  %v1044 = vsel %vm219, %v1041, 0.0
  %1045 = vadd.xlane.f32.xlu0 %v1044
  %v1046 = vpop.xlane.xlu0 %1045
  %v1047 = vsel %vm219, %v1043, 0.0
  %1048 = vadd.xlane.f32.xlu0 %v1047
  %v1049 = vpop.xlane.xlu0 %1048
  %v1050 = vrcp.pop %v1046
  %v1051 = vrcp.pop %v1049
  %v1052 = vmul.f32 %v1041, %v1050
  %v1053 = vmul.f32 %v1043, %v1051
  %1054 = vrot.lane.b32.xlu0 %v209, 80
  %v1055 = vpop.permute.xlu0 %1054
  %v1058 = vsel %vm219, %v1052, 0
  %1060 = vmatprep.subr.mxu0 0.0
  %1061 = vmatpush1.msra.mxu0 %v1055
  %1062 = vmatprep.subr.mxu0 0.0
  %1063 = vmatpush1.msra.mxu0 0.0
  %1064 = vmatprep.subr.mxu0 0.0
  %1065 = vmatpush1.msra.mxu0 0.0
  %1066 = vmatprep.subr.mxu0 0.0
  %1067 = vmatpush1.msra.mxu0 0.0
  %1068 = vmatprep.subr.mxu0 0.0
  %1069 = vmatpush1.msra.mxu0 0.0
  %1070 = vmatprep.subr.mxu0 0.0
  %1071 = vmatpush1.msra.mxu0 0.0
  %1072 = vmatprep.subr.mxu0 0.0
  %1073 = vmatpush1.msra.mxu0 0.0
  %1074 = vmatprep.subr.mxu0 0.0
  %1075 = vmatpush1.msra.mxu0 0.0
  %1076 = vmatprep.subr.mxu0 0.0
  %1077 = vmatpush1.msra.mxu0 0.0
  %1078 = vmatprep.subr.mxu0 0.0
  %1079 = vmatpush1.msra.mxu0 0.0
  %1080 = vmatprep.subr.mxu0 0.0
  %1081 = vmatpush1.msra.mxu0 0.0
  %1082 = vmatprep.subr.mxu0 0.0
  %1083 = vmatpush1.msra.mxu0 0.0
  %1084 = vmatprep.subr.mxu0 0.0
  %1085 = vmatpush1.msra.mxu0 0.0
  %1086 = vmatprep.subr.mxu0 0.0
  %1087 = vmatpush1.msra.mxu0 0.0
  %1088 = vmatprep.subr.mxu0 0.0
  %1089 = vmatpush1.msra.mxu0 0.0
  %1090 = vmatprep.subr.mxu0 0.0
  %1091 = vmatpush1.msra.mxu0 0.0
  %1092 = vmatprep.subr.mxu0 0.0
  %1093 = vmatpush1.msra.mxu0 0.0
  %1094 = vmatprep.subr.mxu0 0.0
  %1095 = vmatpush1.msra.mxu0 0.0
  %1096 = vmatprep.subr.mxu0 0.0
  %1097 = vmatpush1.msra.mxu0 0.0
  %1098 = vmatprep.subr.mxu0 0.0
  %1099 = vmatpush1.msra.mxu0 0.0
  %1100 = vmatprep.subr.mxu0 0.0
  %1101 = vmatpush1.msra.mxu0 0.0
  %1102 = vmatprep.subr.mxu0 0.0
  %1103 = vmatpush1.msra.mxu0 0.0
  %1104 = vmatprep.subr.mxu0 0.0
  %1105 = vmatpush1.msra.mxu0 0.0
  %1106 = vmatprep.subr.mxu0 0.0
  %1107 = vmatpush1.msra.mxu0 0.0
  %1108 = vmatprep.subr.mxu0 0.0
  %1109 = vmatpush1.msra.mxu0 0.0
  %1110 = vmatprep.subr.mxu0 0.0
  %1111 = vmatpush1.msra.mxu0 0.0
  %1112 = vmatprep.subr.mxu0 0.0
  %1113 = vmatpush1.msra.mxu0 0.0
  %1114 = vmatprep.subr.mxu0 0.0
  %1115 = vmatpush1.msra.mxu0 0.0
  %1116 = vmatprep.subr.mxu0 0.0
  %1117 = vmatpush1.msra.mxu0 0.0
  %1118 = vmatprep.subr.mxu0 0.0
  %1119 = vmatpush1.msra.mxu0 0.0
  %1120 = vmatprep.subr.mxu0 0.0
  %1121 = vmatpush1.msra.mxu0 0.0
  %1122 = vmatprep.subr.mxu0 0.0
  %1123 = vmatpush1.msra.mxu0 0.0
  %1124 = vmatprep.mubr.f32.mxu0 0.0
  %1125 = vmatmul.mubr.f32.gmra.mrb[0].mxu0 %v1058
  %v1126 = vpop.f32.mrb[0].mxu0
  %v1127 = vadd.f32 0.0, %v1126
  %v1128 = vpop.f32.mrb[0].mxu0
  %1129 = vdwg.mxu0
  %1130 = vrot.lane.b32.xlu0 %v214, 80
  %v1131 = vpop.permute.xlu0 %1130
  %v1134 = vsel %vm219, %v1053, 0
  %1136 = vmatprep.subr.mxu0 0.0
  %1137 = vmatpush1.msra.mxu0 %v1131
  %1138 = vmatprep.subr.mxu0 0.0
  %1139 = vmatpush1.msra.mxu0 0.0
  %1140 = vmatprep.subr.mxu0 0.0
  %1141 = vmatpush1.msra.mxu0 0.0
  %1142 = vmatprep.subr.mxu0 0.0
  %1143 = vmatpush1.msra.mxu0 0.0
  %1144 = vmatprep.subr.mxu0 0.0
  %1145 = vmatpush1.msra.mxu0 0.0
  %1146 = vmatprep.subr.mxu0 0.0
  %1147 = vmatpush1.msra.mxu0 0.0
  %1148 = vmatprep.subr.mxu0 0.0
  %1149 = vmatpush1.msra.mxu0 0.0
  %1150 = vmatprep.subr.mxu0 0.0
  %1151 = vmatpush1.msra.mxu0 0.0
  %1152 = vmatprep.subr.mxu0 0.0
  %1153 = vmatpush1.msra.mxu0 0.0
  %1154 = vmatprep.subr.mxu0 0.0
  %1155 = vmatpush1.msra.mxu0 0.0
  %1156 = vmatprep.subr.mxu0 0.0
  %1157 = vmatpush1.msra.mxu0 0.0
  %1158 = vmatprep.subr.mxu0 0.0
  %1159 = vmatpush1.msra.mxu0 0.0
  %1160 = vmatprep.subr.mxu0 0.0
  %1161 = vmatpush1.msra.mxu0 0.0
  %1162 = vmatprep.subr.mxu0 0.0
  %1163 = vmatpush1.msra.mxu0 0.0
  %1164 = vmatprep.subr.mxu0 0.0
  %1165 = vmatpush1.msra.mxu0 0.0
  %1166 = vmatprep.subr.mxu0 0.0
  %1167 = vmatpush1.msra.mxu0 0.0
  %1168 = vmatprep.subr.mxu0 0.0
  %1169 = vmatpush1.msra.mxu0 0.0
  %1170 = vmatprep.subr.mxu0 0.0
  %1171 = vmatpush1.msra.mxu0 0.0
  %1172 = vmatprep.subr.mxu0 0.0
  %1173 = vmatpush1.msra.mxu0 0.0
  %1174 = vmatprep.subr.mxu0 0.0
  %1175 = vmatpush1.msra.mxu0 0.0
  %1176 = vmatprep.subr.mxu0 0.0
  %1177 = vmatpush1.msra.mxu0 0.0
  %1178 = vmatprep.subr.mxu0 0.0
  %1179 = vmatpush1.msra.mxu0 0.0
  %1180 = vmatprep.subr.mxu0 0.0
  %1181 = vmatpush1.msra.mxu0 0.0
  %1182 = vmatprep.subr.mxu0 0.0
  %1183 = vmatpush1.msra.mxu0 0.0
  %1184 = vmatprep.subr.mxu0 0.0
  %1185 = vmatpush1.msra.mxu0 0.0
  %1186 = vmatprep.subr.mxu0 0.0
  %1187 = vmatpush1.msra.mxu0 0.0
  %1188 = vmatprep.subr.mxu0 0.0
  %1189 = vmatpush1.msra.mxu0 0.0
  %1190 = vmatprep.subr.mxu0 0.0
  %1191 = vmatpush1.msra.mxu0 0.0
  %1192 = vmatprep.subr.mxu0 0.0
  %1193 = vmatpush1.msra.mxu0 0.0
  %1194 = vmatprep.subr.mxu0 0.0
  %1195 = vmatpush1.msra.mxu0 0.0
  %1196 = vmatprep.subr.mxu0 0.0
  %1197 = vmatpush1.msra.mxu0 0.0
  %1198 = vmatprep.subr.mxu0 0.0
  %1199 = vmatpush1.msra.mxu0 0.0
  %1200 = vmatprep.mubr.f32.mxu0 0.0
  %1201 = vmatmul.mubr.f32.gmra.mrb[0].mxu0 %v1134
  %v1202 = vpop.f32.mrb[0].mxu0
  %v1203 = vadd.f32 0.0, %v1202
  %v1204 = vpop.f32.mrb[0].mxu0
  %1205 = vdwg.mxu0
  %1206 = vrot.lane.b32.xlu0 %v217, 104
  %v1207 = vpop.permute.xlu0 %1206
  %1208 = vrot.lane.b32.xlu0 %v209, 104
  %v1209 = vpop.permute.xlu0 %1208
  %v1210 = vsel %vm219, %v1207, 0
  %v1212 = vsel %vm219, %v1209, 0
  %1214 = vmatprep.subr.mxu0 0.0
  %1215 = vmatpush1.xpose.msra.mxu0 %v1212
  %1216 = vmatprep.subr.mxu0 0.0
  %1217 = vmatpush1.xpose.msra.mxu0 0.0
  %1218 = vmatprep.subr.mxu0 0.0
  %1219 = vmatpush1.xpose.msra.mxu0 0.0
  %1220 = vmatprep.subr.mxu0 0.0
  %1221 = vmatpush1.xpose.msra.mxu0 0.0
  %1222 = vmatprep.subr.mxu0 0.0
  %1223 = vmatpush1.xpose.msra.mxu0 0.0
  %1224 = vmatprep.subr.mxu0 0.0
  %1225 = vmatpush1.xpose.msra.mxu0 0.0
  %1226 = vmatprep.subr.mxu0 0.0
  %1227 = vmatpush1.xpose.msra.mxu0 0.0
  %1228 = vmatprep.subr.mxu0 0.0
  %1229 = vmatpush1.xpose.msra.mxu0 0.0
  %1230 = vmatprep.subr.mxu0 0.0
  %1231 = vmatpush1.xpose.msra.mxu0 0.0
  %1232 = vmatprep.subr.mxu0 0.0
  %1233 = vmatpush1.xpose.msra.mxu0 0.0
  %1234 = vmatprep.subr.mxu0 0.0
  %1235 = vmatpush1.xpose.msra.mxu0 0.0
  %1236 = vmatprep.subr.mxu0 0.0
  %1237 = vmatpush1.xpose.msra.mxu0 0.0
  %1238 = vmatprep.subr.mxu0 0.0
  %1239 = vmatpush1.xpose.msra.mxu0 0.0
  %1240 = vmatprep.subr.mxu0 0.0
  %1241 = vmatpush1.xpose.msra.mxu0 0.0
  %1242 = vmatprep.subr.mxu0 0.0
  %1243 = vmatpush1.xpose.msra.mxu0 0.0
  %1244 = vmatprep.subr.mxu0 0.0
  %1245 = vmatpush1.xpose.msra.mxu0 0.0
  %1246 = vmatprep.subr.mxu0 0.0
  %1247 = vmatpush1.xpose.msra.mxu0 0.0
  %1248 = vmatprep.subr.mxu0 0.0
  %1249 = vmatpush1.xpose.msra.mxu0 0.0
  %1250 = vmatprep.subr.mxu0 0.0
  %1251 = vmatpush1.xpose.msra.mxu0 0.0
  %1252 = vmatprep.subr.mxu0 0.0
  %1253 = vmatpush1.xpose.msra.mxu0 0.0
  %1254 = vmatprep.subr.mxu0 0.0
  %1255 = vmatpush1.xpose.msra.mxu0 0.0
  %1256 = vmatprep.subr.mxu0 0.0
  %1257 = vmatpush1.xpose.msra.mxu0 0.0
  %1258 = vmatprep.subr.mxu0 0.0
  %1259 = vmatpush1.xpose.msra.mxu0 0.0
  %1260 = vmatprep.subr.mxu0 0.0
  %1261 = vmatpush1.xpose.msra.mxu0 0.0
  %1262 = vmatprep.subr.mxu0 0.0
  %1263 = vmatpush1.xpose.msra.mxu0 0.0
  %1264 = vmatprep.subr.mxu0 0.0
  %1265 = vmatpush1.xpose.msra.mxu0 0.0
  %1266 = vmatprep.subr.mxu0 0.0
  %1267 = vmatpush1.xpose.msra.mxu0 0.0
  %1268 = vmatprep.subr.mxu0 0.0
  %1269 = vmatpush1.xpose.msra.mxu0 0.0
  %1270 = vmatprep.subr.mxu0 0.0
  %1271 = vmatpush1.xpose.msra.mxu0 0.0
  %1272 = vmatprep.subr.mxu0 0.0
  %1273 = vmatpush1.xpose.msra.mxu0 0.0
  %1274 = vmatprep.subr.mxu0 0.0
  %1275 = vmatpush1.xpose.msra.mxu0 0.0
  %1276 = vmatprep.subr.mxu0 0.0
  %1277 = vmatpush1.xpose.msra.mxu0 0.0
  %1278 = vmatprep.mubr.f32.mxu0 0.0
  %1279 = vmatmul.mubr.f32.gmra.mrb[0].mxu0 %v1210
  %v1280 = vpop.f32.mrb[0].mxu0
  %v1281 = vadd.f32 0.0, %v1280
  %v1282 = vpop.f32.mrb[0].mxu0
  %1283 = vdwg.mxu0
  %1284 = vrot.lane.b32.xlu0 %v218, 104
  %v1285 = vpop.permute.xlu0 %1284
  %1286 = vrot.lane.b32.xlu0 %v214, 104
  %v1287 = vpop.permute.xlu0 %1286
  %v1288 = vsel %vm219, %v1285, 0
  %v1290 = vsel %vm219, %v1287, 0
  %1292 = vmatprep.subr.mxu0 0.0
  %1293 = vmatpush1.xpose.msra.mxu0 %v1290
  %1294 = vmatprep.subr.mxu0 0.0
  %1295 = vmatpush1.xpose.msra.mxu0 0.0
  %1296 = vmatprep.subr.mxu0 0.0
  %1297 = vmatpush1.xpose.msra.mxu0 0.0
  %1298 = vmatprep.subr.mxu0 0.0
  %1299 = vmatpush1.xpose.msra.mxu0 0.0
  %1300 = vmatprep.subr.mxu0 0.0
  %1301 = vmatpush1.xpose.msra.mxu0 0.0
  %1302 = vmatprep.subr.mxu0 0.0
  %1303 = vmatpush1.xpose.msra.mxu0 0.0
  %1304 = vmatprep.subr.mxu0 0.0
  %1305 = vmatpush1.xpose.msra.mxu0 0.0
  %1306 = vmatprep.subr.mxu0 0.0
  %1307 = vmatpush1.xpose.msra.mxu0 0.0
  %1308 = vmatprep.subr.mxu0 0.0
  %1309 = vmatpush1.xpose.msra.mxu0 0.0
  %1310 = vmatprep.subr.mxu0 0.0
  %1311 = vmatpush1.xpose.msra.mxu0 0.0
  %1312 = vmatprep.subr.mxu0 0.0
  %1313 = vmatpush1.xpose.msra.mxu0 0.0
  %1314 = vmatprep.subr.mxu0 0.0
  %1315 = vmatpush1.xpose.msra.mxu0 0.0
  %1316 = vmatprep.subr.mxu0 0.0
  %1317 = vmatpush1.xpose.msra.mxu0 0.0
  %1318 = vmatprep.subr.mxu0 0.0
  %1319 = vmatpush1.xpose.msra.mxu0 0.0
  %1320 = vmatprep.subr.mxu0 0.0
  %1321 = vmatpush1.xpose.msra.mxu0 0.0
  %1322 = vmatprep.subr.mxu0 0.0
  %1323 = vmatpush1.xpose.msra.mxu0 0.0
  %1324 = vmatprep.subr.mxu0 0.0
  %1325 = vmatpush1.xpose.msra.mxu0 0.0
  %1326 = vmatprep.subr.mxu0 0.0
  %1327 = vmatpush1.xpose.msra.mxu0 0.0
  %1328 = vmatprep.subr.mxu0 0.0
  %1329 = vmatpush1.xpose.msra.mxu0 0.0
  %1330 = vmatprep.subr.mxu0 0.0
  %1331 = vmatpush1.xpose.msra.mxu0 0.0
  %1332 = vmatprep.subr.mxu0 0.0
  %1333 = vmatpush1.xpose.msra.mxu0 0.0
  %1334 = vmatprep.subr.mxu0 0.0
  %1335 = vmatpush1.xpose.msra.mxu0 0.0
  %1336 = vmatprep.subr.mxu0 0.0
  %1337 = vmatpush1.xpose.msra.mxu0 0.0
  %1338 = vmatprep.subr.mxu0 0.0
  %1339 = vmatpush1.xpose.msra.mxu0 0.0
  %1340 = vmatprep.subr.mxu0 0.0
  %1341 = vmatpush1.xpose.msra.mxu0 0.0
  %1342 = vmatprep.subr.mxu0 0.0
  %1343 = vmatpush1.xpose.msra.mxu0 0.0
  %1344 = vmatprep.subr.mxu0 0.0
  %1345 = vmatpush1.xpose.msra.mxu0 0.0
  %1346 = vmatprep.subr.mxu0 0.0
  %1347 = vmatpush1.xpose.msra.mxu0 0.0
  %1348 = vmatprep.subr.mxu0 0.0
  %1349 = vmatpush1.xpose.msra.mxu0 0.0
  %1350 = vmatprep.subr.mxu0 0.0
  %1351 = vmatpush1.xpose.msra.mxu0 0.0
  %1352 = vmatprep.subr.mxu0 0.0
  %1353 = vmatpush1.xpose.msra.mxu0 0.0
  %1354 = vmatprep.subr.mxu0 0.0
  %1355 = vmatpush1.xpose.msra.mxu0 0.0
  %1356 = vmatprep.mubr.f32.mxu0 0.0
  %1357 = vmatmul.mubr.f32.gmra.mrb[0].mxu0 %v1288
  %v1358 = vpop.f32.mrb[0].mxu0
  %v1359 = vadd.f32 0.0, %v1358
  %v1360 = vpop.f32.mrb[0].mxu0
  %1361 = vdwg.mxu0
  %v1362 = vsel %vm219, %v1281, -inf
  %1363 = vmax.xlane.f32.xlu0 %v1362
  %v1364 = vpop.xlane.xlu0 %1363
  %v1365 = vsel %vm219, %v1359, -inf
  %1366 = vmax.xlane.f32.xlu0 %v1365
  %v1367 = vpop.xlane.xlu0 %1366
  %v1368 = vsub.f32 %v1281, %v1364
  %v1369 = vsub.f32 %v1359, %v1367
  %v1370 = vmul.f32 %v1368, 1.442695
  %v1371 = vpow.pop %v1370
  %v1372 = vmul.f32 %v1369, 1.442695
  %v1373 = vpow.pop %v1372
  %v1374 = vsel %vm219, %v1371, 0.0
  %1375 = vadd.xlane.f32.xlu0 %v1374
  %v1376 = vpop.xlane.xlu0 %1375
  %v1377 = vsel %vm219, %v1373, 0.0
  %1378 = vadd.xlane.f32.xlu0 %v1377
  %v1379 = vpop.xlane.xlu0 %1378
  %v1380 = vrcp.pop %v1376
  %v1381 = vrcp.pop %v1379
  %v1382 = vmul.f32 %v1371, %v1380
  %v1383 = vmul.f32 %v1373, %v1381
  %1384 = vrot.lane.b32.xlu0 %v209, 72
  %v1385 = vpop.permute.xlu0 %1384
  %v1388 = vsel %vm219, %v1382, 0
  %1390 = vmatprep.subr.mxu0 0.0
  %1391 = vmatpush1.msra.mxu0 %v1385
  %1392 = vmatprep.subr.mxu0 0.0
  %1393 = vmatpush1.msra.mxu0 0.0
  %1394 = vmatprep.subr.mxu0 0.0
  %1395 = vmatpush1.msra.mxu0 0.0
  %1396 = vmatprep.subr.mxu0 0.0
  %1397 = vmatpush1.msra.mxu0 0.0
  %1398 = vmatprep.subr.mxu0 0.0
  %1399 = vmatpush1.msra.mxu0 0.0
  %1400 = vmatprep.subr.mxu0 0.0
  %1401 = vmatpush1.msra.mxu0 0.0
  %1402 = vmatprep.subr.mxu0 0.0
  %1403 = vmatpush1.msra.mxu0 0.0
  %1404 = vmatprep.subr.mxu0 0.0
  %1405 = vmatpush1.msra.mxu0 0.0
  %1406 = vmatprep.subr.mxu0 0.0
  %1407 = vmatpush1.msra.mxu0 0.0
  %1408 = vmatprep.subr.mxu0 0.0
  %1409 = vmatpush1.msra.mxu0 0.0
  %1410 = vmatprep.subr.mxu0 0.0
  %1411 = vmatpush1.msra.mxu0 0.0
  %1412 = vmatprep.subr.mxu0 0.0
  %1413 = vmatpush1.msra.mxu0 0.0
  %1414 = vmatprep.subr.mxu0 0.0
  %1415 = vmatpush1.msra.mxu0 0.0
  %1416 = vmatprep.subr.mxu0 0.0
  %1417 = vmatpush1.msra.mxu0 0.0
  %1418 = vmatprep.subr.mxu0 0.0
  %1419 = vmatpush1.msra.mxu0 0.0
  %1420 = vmatprep.subr.mxu0 0.0
  %1421 = vmatpush1.msra.mxu0 0.0
  %1422 = vmatprep.subr.mxu0 0.0
  %1423 = vmatpush1.msra.mxu0 0.0
  %1424 = vmatprep.subr.mxu0 0.0
  %1425 = vmatpush1.msra.mxu0 0.0
  %1426 = vmatprep.subr.mxu0 0.0
  %1427 = vmatpush1.msra.mxu0 0.0
  %1428 = vmatprep.subr.mxu0 0.0
  %1429 = vmatpush1.msra.mxu0 0.0
  %1430 = vmatprep.subr.mxu0 0.0
  %1431 = vmatpush1.msra.mxu0 0.0
  %1432 = vmatprep.subr.mxu0 0.0
  %1433 = vmatpush1.msra.mxu0 0.0
  %1434 = vmatprep.subr.mxu0 0.0
  %1435 = vmatpush1.msra.mxu0 0.0
  %1436 = vmatprep.subr.mxu0 0.0
  %1437 = vmatpush1.msra.mxu0 0.0
  %1438 = vmatprep.subr.mxu0 0.0
  %1439 = vmatpush1.msra.mxu0 0.0
  %1440 = vmatprep.subr.mxu0 0.0
  %1441 = vmatpush1.msra.mxu0 0.0
  %1442 = vmatprep.subr.mxu0 0.0
  %1443 = vmatpush1.msra.mxu0 0.0
  %1444 = vmatprep.subr.mxu0 0.0
  %1445 = vmatpush1.msra.mxu0 0.0
  %1446 = vmatprep.subr.mxu0 0.0
  %1447 = vmatpush1.msra.mxu0 0.0
  %1448 = vmatprep.subr.mxu0 0.0
  %1449 = vmatpush1.msra.mxu0 0.0
  %1450 = vmatprep.subr.mxu0 0.0
  %1451 = vmatpush1.msra.mxu0 0.0
  %1452 = vmatprep.subr.mxu0 0.0
  %1453 = vmatpush1.msra.mxu0 0.0
  %1454 = vmatprep.mubr.f32.mxu0 0.0
  %1455 = vmatmul.mubr.f32.gmra.mrb[0].mxu0 %v1388
  %v1456 = vpop.f32.mrb[0].mxu0
  %v1457 = vadd.f32 0.0, %v1456
  %v1458 = vpop.f32.mrb[0].mxu0
  %1459 = vdwg.mxu0
  %1460 = vrot.lane.b32.xlu0 %v214, 72
  %v1461 = vpop.permute.xlu0 %1460
  %v1464 = vsel %vm219, %v1383, 0
  %1466 = vmatprep.subr.mxu0 0.0
  %1467 = vmatpush1.msra.mxu0 %v1461
  %1468 = vmatprep.subr.mxu0 0.0
  %1469 = vmatpush1.msra.mxu0 0.0
  %1470 = vmatprep.subr.mxu0 0.0
  %1471 = vmatpush1.msra.mxu0 0.0
  %1472 = vmatprep.subr.mxu0 0.0
  %1473 = vmatpush1.msra.mxu0 0.0
  %1474 = vmatprep.subr.mxu0 0.0
  %1475 = vmatpush1.msra.mxu0 0.0
  %1476 = vmatprep.subr.mxu0 0.0
  %1477 = vmatpush1.msra.mxu0 0.0
  %1478 = vmatprep.subr.mxu0 0.0
  %1479 = vmatpush1.msra.mxu0 0.0
  %1480 = vmatprep.subr.mxu0 0.0
  %1481 = vmatpush1.msra.mxu0 0.0
  %1482 = vmatprep.subr.mxu0 0.0
  %1483 = vmatpush1.msra.mxu0 0.0
  %1484 = vmatprep.subr.mxu0 0.0
  %1485 = vmatpush1.msra.mxu0 0.0
  %1486 = vmatprep.subr.mxu0 0.0
  %1487 = vmatpush1.msra.mxu0 0.0
  %1488 = vmatprep.subr.mxu0 0.0
  %1489 = vmatpush1.msra.mxu0 0.0
  %1490 = vmatprep.subr.mxu0 0.0
  %1491 = vmatpush1.msra.mxu0 0.0
  %1492 = vmatprep.subr.mxu0 0.0
  %1493 = vmatpush1.msra.mxu0 0.0
  %1494 = vmatprep.subr.mxu0 0.0
  %1495 = vmatpush1.msra.mxu0 0.0
  %1496 = vmatprep.subr.mxu0 0.0
  %1497 = vmatpush1.msra.mxu0 0.0
  %1498 = vmatprep.subr.mxu0 0.0
  %1499 = vmatpush1.msra.mxu0 0.0
  %1500 = vmatprep.subr.mxu0 0.0
  %1501 = vmatpush1.msra.mxu0 0.0
  %1502 = vmatprep.subr.mxu0 0.0
  %1503 = vmatpush1.msra.mxu0 0.0
  %1504 = vmatprep.subr.mxu0 0.0
  %1505 = vmatpush1.msra.mxu0 0.0
  %1506 = vmatprep.subr.mxu0 0.0
  %1507 = vmatpush1.msra.mxu0 0.0
  %1508 = vmatprep.subr.mxu0 0.0
  %1509 = vmatpush1.msra.mxu0 0.0
  %1510 = vmatprep.subr.mxu0 0.0
  %1511 = vmatpush1.msra.mxu0 0.0
  %1512 = vmatprep.subr.mxu0 0.0
  %1513 = vmatpush1.msra.mxu0 0.0
  %1514 = vmatprep.subr.mxu0 0.0
  %1515 = vmatpush1.msra.mxu0 0.0
  %1516 = vmatprep.subr.mxu0 0.0
  %1517 = vmatpush1.msra.mxu0 0.0
  %1518 = vmatprep.subr.mxu0 0.0
  %1519 = vmatpush1.msra.mxu0 0.0
  %1520 = vmatprep.subr.mxu0 0.0
  %1521 = vmatpush1.msra.mxu0 0.0
  %1522 = vmatprep.subr.mxu0 0.0
  %1523 = vmatpush1.msra.mxu0 0.0
  %1524 = vmatprep.subr.mxu0 0.0
  %1525 = vmatpush1.msra.mxu0 0.0
  %1526 = vmatprep.subr.mxu0 0.0
  %1527 = vmatpush1.msra.mxu0 0.0
  %1528 = vmatprep.subr.mxu0 0.0
  %1529 = vmatpush1.msra.mxu0 0.0
  %1530 = vmatprep.mubr.f32.mxu0 0.0
  %1531 = vmatmul.mubr.f32.gmra.mrb[0].mxu0 %v1464
  %v1532 = vpop.f32.mrb[0].mxu0
  %v1533 = vadd.f32 0.0, %v1532
  %v1534 = vpop.f32.mrb[0].mxu0
  %1535 = vdwg.mxu0
  %1538 = vrot.lane.b32.xlu0 %v797, 8
  %v1539 = vpop.permute.xlu0 %1538
  %1540 = vrot.lane.b32.xlu0 %v873, 8
  %v1541 = vpop.permute.xlu0 %1540
  %1546 = vrot.lane.b32.xlu0 %v1127, 16
  %v1547 = vpop.permute.xlu0 %1546
  %1548 = vrot.lane.b32.xlu0 %v1203, 16
  %v1549 = vpop.permute.xlu0 %1548
  %1554 = vrot.lane.b32.xlu0 %v1457, 24
  %v1555 = vpop.permute.xlu0 %1554
  %1556 = vrot.lane.b32.xlu0 %v1533, 24
  %v1557 = vpop.permute.xlu0 %1556
  %v1560 = vsel %vm219, %v467, %v1539
  %v1561 = vsel %vm219, %v543, %v1541
  %vm1562 = vcmask 130048
  %v1563 = vsel %vm1562, %v1560, %v1547
  %v1564 = vsel %vm1562, %v1561, %v1549
  %vm1565 = vcmask 195584
  %v1566 = vsel %vm1565, %v1563, %v1555
  %v1567 = vsel %vm1565, %v1564, %v1557
  %v1568 = vld [vmem:[%s4] sm:$0xff]
  %v1569 = vld [vmem:[%s4 + $0x8] sm:$0xff]
  %v1570 = vld [vmem:[%s4 + $0x10] sm:$0xff]
  %v1571 = vld [vmem:[%s4 + $0x18] sm:$0xff]
  %v1572 = vlaneseq
  %v1573 = vshrl.u32 %v1572, 7
  %v1574 = vsub.s32 2, %v1573
  %v1575 = vrot.slane %v33, %v1574
  %v1577 = vsel %vm43, %v1566, 0
  %v1580 = vsel %vm43, %v1567, 0
  %1582 = vmatprep.subr.mxu0 0.0
  %1583 = vmatpush1.msra.mxu0 %v1568
  %1584 = vmatprep.subr.mxu0 0.0
  %1585 = vmatpush1.msra.mxu0 %v1569
  %1586 = vmatprep.subr.mxu0 0.0
  %1587 = vmatpush1.msra.mxu0 %v1570
  %1588 = vmatprep.subr.mxu0 0.0
  %1589 = vmatpush1.msra.mxu0 %v1571
  %1590 = vmatprep.subr.mxu0 0.0
  %1591 = vmatpush1.msra.mxu0 0.0
  %1592 = vmatprep.subr.mxu0 0.0
  %1593 = vmatpush1.msra.mxu0 0.0
  %1594 = vmatprep.subr.mxu0 0.0
  %1595 = vmatpush1.msra.mxu0 0.0
  %1596 = vmatprep.subr.mxu0 0.0
  %1597 = vmatpush1.msra.mxu0 0.0
  %1598 = vmatprep.subr.mxu0 0.0
  %1599 = vmatpush1.msra.mxu0 0.0
  %1600 = vmatprep.subr.mxu0 0.0
  %1601 = vmatpush1.msra.mxu0 0.0
  %1602 = vmatprep.subr.mxu0 0.0
  %1603 = vmatpush1.msra.mxu0 0.0
  %1604 = vmatprep.subr.mxu0 0.0
  %1605 = vmatpush1.msra.mxu0 0.0
  %1606 = vmatprep.subr.mxu0 0.0
  %1607 = vmatpush1.msra.mxu0 0.0
  %1608 = vmatprep.subr.mxu0 0.0
  %1609 = vmatpush1.msra.mxu0 0.0
  %1610 = vmatprep.subr.mxu0 0.0
  %1611 = vmatpush1.msra.mxu0 0.0
  %1612 = vmatprep.subr.mxu0 0.0
  %1613 = vmatpush1.msra.mxu0 0.0
  %1614 = vmatprep.subr.mxu0 0.0
  %1615 = vmatpush1.msra.mxu0 0.0
  %1616 = vmatprep.subr.mxu0 0.0
  %1617 = vmatpush1.msra.mxu0 0.0
  %1618 = vmatprep.subr.mxu0 0.0
  %1619 = vmatpush1.msra.mxu0 0.0
  %1620 = vmatprep.subr.mxu0 0.0
  %1621 = vmatpush1.msra.mxu0 0.0
  %1622 = vmatprep.subr.mxu0 0.0
  %1623 = vmatpush1.msra.mxu0 0.0
  %1624 = vmatprep.subr.mxu0 0.0
  %1625 = vmatpush1.msra.mxu0 0.0
  %1626 = vmatprep.subr.mxu0 0.0
  %1627 = vmatpush1.msra.mxu0 0.0
  %1628 = vmatprep.subr.mxu0 0.0
  %1629 = vmatpush1.msra.mxu0 0.0
  %1630 = vmatprep.subr.mxu0 0.0
  %1631 = vmatpush1.msra.mxu0 0.0
  %1632 = vmatprep.subr.mxu0 0.0
  %1633 = vmatpush1.msra.mxu0 0.0
  %1634 = vmatprep.subr.mxu0 0.0
  %1635 = vmatpush1.msra.mxu0 0.0
  %1636 = vmatprep.subr.mxu0 0.0
  %1637 = vmatpush1.msra.mxu0 0.0
  %1638 = vmatprep.subr.mxu0 0.0
  %1639 = vmatpush1.msra.mxu0 0.0
  %1640 = vmatprep.subr.mxu0 0.0
  %1641 = vmatpush1.msra.mxu0 0.0
  %1642 = vmatprep.subr.mxu0 0.0
  %1643 = vmatpush1.msra.mxu0 0.0
  %1644 = vmatprep.subr.mxu0 0.0
  %1645 = vmatpush1.msra.mxu0 0.0
  %1646 = vmatprep.mubr.f32.mxu0 0.0
  %1647 = vmatmul.mubr.f32.gmra.mrb[0].mxu0 %v1577
  %v1648 = vpop.f32.mrb[0].mxu0
  %v1649 = vadd.f32 %v1575, %v1648
  %v1650 = vpop.f32.mrb[0].mxu0
  %1651 = vmatprep.mubr.f32.mxu0 0.0
  %1652 = vmatmul.mubr.f32.gmra.mrb[0].mxu0 %v1580
  %v1653 = vpop.f32.mrb[0].mxu0
  %v1654 = vadd.f32 %v1575, %v1653
  %v1655 = vpop.f32.mrb[0].mxu0
  %1656 = vdwg.mxu0
  %v1657 = vadd.f32 %v29, %v1649
  %v1658 = vadd.f32 %v30, %v1654
  %v1659 = vsel %vm43, %v1657, 0.0
  %1660 = vadd.xlane.f32.xlu0 %v1659
  %v1661 = vpop.xlane.xlu0 %1660
  %v1662 = vsel %vm43, %v1658, 0.0
  %1663 = vadd.xlane.f32.xlu0 %v1662
  %v1664 = vpop.xlane.xlu0 %1663
  %v1665 = vrcp.pop 32.0
  %v1666 = vmul.f32 %v1661, %v1665
  %v1667 = vmul.f32 %v1664, %v1665
  %v1668 = vsub.f32 %v1657, %v1666
  %v1669 = vsub.f32 %v1658, %v1667
  %v1670 = vmul.f32 %v1668, %v1668
  %v1671 = vmul.f32 %v1669, %v1669
  %v1672 = vsel %vm43, %v1670, 0.0
  %1673 = vadd.xlane.f32.xlu0 %v1672
  %v1674 = vpop.xlane.xlu0 %1673
  %v1675 = vsel %vm43, %v1671, 0.0
  %1676 = vadd.xlane.f32.xlu0 %v1675
  %v1677 = vpop.xlane.xlu0 %1676
  %v1678 = vmul.f32 %v1674, %v1665
  %v1679 = vmul.f32 %v1677, %v1665
  %v1680 = vadd.f32 %v1678, 1e-05
  %v1681 = vadd.f32 %v1679, 1e-05
  %v1682 = vrsqrt.pop %v1680
  %v1683 = vrsqrt.pop %v1681
  %v1684 = vmul.f32 %v1668, %v1682
  %v1685 = vmul.f32 %v1669, %v1683
  %v1686 = vlaneseq
  %v1687 = vshrl.u32 %v1686, 7
  %v1688 = vsub.s32 5, %v1687
  %v1689 = vrot.slane %v33, %v1688
  %v1690 = vmul.f32 %v1684, %v1689
  %v1691 = vmul.f32 %v1685, %v1689
  %v1692 = vlaneseq
  %v1693 = vshrl.u32 %v1692, 7
  %v1694 = vsub.s32 6, %v1693
  %v1695 = vrot.slane %v33, %v1694
  %v1696 = vadd.f32 %v1690, %v1695
  %v1697 = vadd.f32 %v1691, %v1695
  %v1698 = vld [vmem:[%s5] sm:$0xff]
  %v1699 = vld [vmem:[%s5 + $0x8] sm:$0xff]
  %v1700 = vld [vmem:[%s5 + $0x10] sm:$0xff]
  %v1701 = vld [vmem:[%s5 + $0x18] sm:$0xff]
  %v1702 = vlaneseq
  %v1703 = vshrl.u32 %v1702, 7
  %v1704 = vsub.s32 3, %v1703
  %v1705 = vrot.slane %v33, %v1704
  %v1707 = vsel %vm43, %v1696, 0
  %v1710 = vsel %vm43, %v1697, 0
  %1712 = vmatprep.subr.mxu0 0.0
  %1713 = vmatpush1.msra.mxu0 %v1698
  %1714 = vmatprep.subr.mxu0 0.0
  %1715 = vmatpush1.msra.mxu0 %v1699
  %1716 = vmatprep.subr.mxu0 0.0
  %1717 = vmatpush1.msra.mxu0 %v1700
  %1718 = vmatprep.subr.mxu0 0.0
  %1719 = vmatpush1.msra.mxu0 %v1701
  %1720 = vmatprep.subr.mxu0 0.0
  %1721 = vmatpush1.msra.mxu0 0.0
  %1722 = vmatprep.subr.mxu0 0.0
  %1723 = vmatpush1.msra.mxu0 0.0
  %1724 = vmatprep.subr.mxu0 0.0
  %1725 = vmatpush1.msra.mxu0 0.0
  %1726 = vmatprep.subr.mxu0 0.0
  %1727 = vmatpush1.msra.mxu0 0.0
  %1728 = vmatprep.subr.mxu0 0.0
  %1729 = vmatpush1.msra.mxu0 0.0
  %1730 = vmatprep.subr.mxu0 0.0
  %1731 = vmatpush1.msra.mxu0 0.0
  %1732 = vmatprep.subr.mxu0 0.0
  %1733 = vmatpush1.msra.mxu0 0.0
  %1734 = vmatprep.subr.mxu0 0.0
  %1735 = vmatpush1.msra.mxu0 0.0
  %1736 = vmatprep.subr.mxu0 0.0
  %1737 = vmatpush1.msra.mxu0 0.0
  %1738 = vmatprep.subr.mxu0 0.0
  %1739 = vmatpush1.msra.mxu0 0.0
  %1740 = vmatprep.subr.mxu0 0.0
  %1741 = vmatpush1.msra.mxu0 0.0
  %1742 = vmatprep.subr.mxu0 0.0
  %1743 = vmatpush1.msra.mxu0 0.0
  %1744 = vmatprep.subr.mxu0 0.0
  %1745 = vmatpush1.msra.mxu0 0.0
  %1746 = vmatprep.subr.mxu0 0.0
  %1747 = vmatpush1.msra.mxu0 0.0
  %1748 = vmatprep.subr.mxu0 0.0
  %1749 = vmatpush1.msra.mxu0 0.0
  %1750 = vmatprep.subr.mxu0 0.0
  %1751 = vmatpush1.msra.mxu0 0.0
  %1752 = vmatprep.subr.mxu0 0.0
  %1753 = vmatpush1.msra.mxu0 0.0
  %1754 = vmatprep.subr.mxu0 0.0
  %1755 = vmatpush1.msra.mxu0 0.0
  %1756 = vmatprep.subr.mxu0 0.0
  %1757 = vmatpush1.msra.mxu0 0.0
  %1758 = vmatprep.subr.mxu0 0.0
  %1759 = vmatpush1.msra.mxu0 0.0
  %1760 = vmatprep.subr.mxu0 0.0
  %1761 = vmatpush1.msra.mxu0 0.0
  %1762 = vmatprep.subr.mxu0 0.0
  %1763 = vmatpush1.msra.mxu0 0.0
  %1764 = vmatprep.subr.mxu0 0.0
  %1765 = vmatpush1.msra.mxu0 0.0
  %1766 = vmatprep.subr.mxu0 0.0
  %1767 = vmatpush1.msra.mxu0 0.0
  %1768 = vmatprep.subr.mxu0 0.0
  %1769 = vmatpush1.msra.mxu0 0.0
  %1770 = vmatprep.subr.mxu0 0.0
  %1771 = vmatpush1.msra.mxu0 0.0
  %1772 = vmatprep.subr.mxu0 0.0
  %1773 = vmatpush1.msra.mxu0 0.0
  %1774 = vmatprep.subr.mxu0 0.0
  %1775 = vmatpush1.msra.mxu0 0.0
  %1776 = vmatprep.mubr.f32.mxu0 0.0
  %1777 = vmatmul.mubr.f32.gmra.mrb[0].mxu0 %v1707
  %v1778 = vpop.f32.mrb[0].mxu0
  %v1779 = vadd.f32 %v1705, %v1778
  %v1780 = vpop.f32.mrb[0].mxu0
  %1781 = vmatprep.mubr.f32.mxu0 0.0
  %1782 = vmatmul.mubr.f32.gmra.mrb[0].mxu0 %v1710
  %v1783 = vpop.f32.mrb[0].mxu0
  %v1784 = vadd.f32 %v1705, %v1783
  %v1785 = vpop.f32.mrb[0].mxu0
  %1786 = vdwg.mxu0
  %v1787 = vmax.f32 %v1779, 0.0
  %v1788 = vmax.f32 %v1784, 0.0
  %v1789 = vld [vmem:[%s6] sm:$0xff]
  %v1790 = vld [vmem:[%s6 + $0x8] sm:$0xff]
  %v1791 = vld [vmem:[%s6 + $0x10] sm:$0xff]
  %v1792 = vld [vmem:[%s6 + $0x18] sm:$0xff]
  %v1793 = vld [vmem:[%s6 + $0x20] sm:$0xff]
  %v1794 = vld [vmem:[%s6 + $0x28] sm:$0xff]
  %v1795 = vld [vmem:[%s6 + $0x30] sm:$0xff]
  %v1796 = vld [vmem:[%s6 + $0x38] sm:$0xff]
  %v1797 = vlaneseq
  %v1798 = vshrl.u32 %v1797, 7
  %v1799 = vsub.s32 4, %v1798
  %v1800 = vrot.slane %v33, %v1799
  %vm1801 = vcmask 523264
  %v1803 = vsel %vm1801, %v1787, 0
  %v1806 = vsel %vm1801, %v1788, 0
  %1808 = vmatprep.subr.mxu0 0.0
  %1809 = vmatpush1.msra.mxu0 %v1789
  %1810 = vmatprep.subr.mxu0 0.0
  %1811 = vmatpush1.msra.mxu0 %v1790
  %1812 = vmatprep.subr.mxu0 0.0
  %1813 = vmatpush1.msra.mxu0 %v1791
  %1814 = vmatprep.subr.mxu0 0.0
  %1815 = vmatpush1.msra.mxu0 %v1792
  %1816 = vmatprep.subr.mxu0 0.0
  %1817 = vmatpush1.msra.mxu0 %v1793
  %1818 = vmatprep.subr.mxu0 0.0
  %1819 = vmatpush1.msra.mxu0 %v1794
  %1820 = vmatprep.subr.mxu0 0.0
  %1821 = vmatpush1.msra.mxu0 %v1795
  %1822 = vmatprep.subr.mxu0 0.0
  %1823 = vmatpush1.msra.mxu0 %v1796
  %1824 = vmatprep.subr.mxu0 0.0
  %1825 = vmatpush1.msra.mxu0 0.0
  %1826 = vmatprep.subr.mxu0 0.0
  %1827 = vmatpush1.msra.mxu0 0.0
  %1828 = vmatprep.subr.mxu0 0.0
  %1829 = vmatpush1.msra.mxu0 0.0
  %1830 = vmatprep.subr.mxu0 0.0
  %1831 = vmatpush1.msra.mxu0 0.0
  %1832 = vmatprep.subr.mxu0 0.0
  %1833 = vmatpush1.msra.mxu0 0.0
  %1834 = vmatprep.subr.mxu0 0.0
  %1835 = vmatpush1.msra.mxu0 0.0
  %1836 = vmatprep.subr.mxu0 0.0
  %1837 = vmatpush1.msra.mxu0 0.0
  %1838 = vmatprep.subr.mxu0 0.0
  %1839 = vmatpush1.msra.mxu0 0.0
  %1840 = vmatprep.subr.mxu0 0.0
  %1841 = vmatpush1.msra.mxu0 0.0
  %1842 = vmatprep.subr.mxu0 0.0
  %1843 = vmatpush1.msra.mxu0 0.0
  %1844 = vmatprep.subr.mxu0 0.0
  %1845 = vmatpush1.msra.mxu0 0.0
  %1846 = vmatprep.subr.mxu0 0.0
  %1847 = vmatpush1.msra.mxu0 0.0
  %1848 = vmatprep.subr.mxu0 0.0
  %1849 = vmatpush1.msra.mxu0 0.0
  %1850 = vmatprep.subr.mxu0 0.0
  %1851 = vmatpush1.msra.mxu0 0.0
  %1852 = vmatprep.subr.mxu0 0.0
  %1853 = vmatpush1.msra.mxu0 0.0
  %1854 = vmatprep.subr.mxu0 0.0
  %1855 = vmatpush1.msra.mxu0 0.0
  %1856 = vmatprep.subr.mxu0 0.0
  %1857 = vmatpush1.msra.mxu0 0.0
  %1858 = vmatprep.subr.mxu0 0.0
  %1859 = vmatpush1.msra.mxu0 0.0
  %1860 = vmatprep.subr.mxu0 0.0
  %1861 = vmatpush1.msra.mxu0 0.0
  %1862 = vmatprep.subr.mxu0 0.0
  %1863 = vmatpush1.msra.mxu0 0.0
  %1864 = vmatprep.subr.mxu0 0.0
  %1865 = vmatpush1.msra.mxu0 0.0
  %1866 = vmatprep.subr.mxu0 0.0
  %1867 = vmatpush1.msra.mxu0 0.0
  %1868 = vmatprep.subr.mxu0 0.0
  %1869 = vmatpush1.msra.mxu0 0.0
  %1870 = vmatprep.subr.mxu0 0.0
  %1871 = vmatpush1.msra.mxu0 0.0
  %1872 = vmatprep.mubr.f32.mxu0 0.0
  %1873 = vmatmul.mubr.f32.gmra.mrb[0].mxu0 %v1803
  %v1874 = vpop.f32.mrb[0].mxu0
  %v1875 = vadd.f32 %v1800, %v1874
  %v1876 = vpop.f32.mrb[0].mxu0
  %1877 = vmatprep.mubr.f32.mxu0 0.0
  %1878 = vmatmul.mubr.f32.gmra.mrb[0].mxu0 %v1806
  %v1879 = vpop.f32.mrb[0].mxu0
  %v1880 = vadd.f32 %v1800, %v1879
  %v1881 = vpop.f32.mrb[0].mxu0
  %1882 = vdwg.mxu0
  %v1883 = vadd.f32 %v1696, %v1875
  %v1884 = vadd.f32 %v1697, %v1880
  %v1885 = vsel %vm43, %v1883, 0.0
  %1886 = vadd.xlane.f32.xlu0 %v1885
  %v1887 = vpop.xlane.xlu0 %1886
  %v1888 = vsel %vm43, %v1884, 0.0
  %1889 = vadd.xlane.f32.xlu0 %v1888
  %v1890 = vpop.xlane.xlu0 %1889
  %v1891 = vmul.f32 %v1887, %v1665
  %v1892 = vmul.f32 %v1890, %v1665
  %v1893 = vsub.f32 %v1883, %v1891
  %v1894 = vsub.f32 %v1884, %v1892
  %v1895 = vmul.f32 %v1893, %v1893
  %v1896 = vmul.f32 %v1894, %v1894
  %v1897 = vsel %vm43, %v1895, 0.0
  %1898 = vadd.xlane.f32.xlu0 %v1897
  %v1899 = vpop.xlane.xlu0 %1898
  %v1900 = vsel %vm43, %v1896, 0.0
  %1901 = vadd.xlane.f32.xlu0 %v1900
  %v1902 = vpop.xlane.xlu0 %1901
  %v1903 = vmul.f32 %v1899, %v1665
  %v1904 = vmul.f32 %v1902, %v1665
  %v1905 = vadd.f32 %v1903, 1e-05
  %v1906 = vadd.f32 %v1904, 1e-05
  %v1907 = vrsqrt.pop %v1905
  %v1908 = vrsqrt.pop %v1906
  %v1909 = vmul.f32 %v1893, %v1907
  %v1910 = vmul.f32 %v1894, %v1908
  %v1911 = vlaneseq
  %v1912 = vshrl.u32 %v1911, 7
  %v1913 = vsub.s32 7, %v1912
  %v1914 = vrot.slane %v33, %v1913
  %v1915 = vmul.f32 %v1909, %v1914
  %v1916 = vmul.f32 %v1910, %v1914
  %v1917 = vlaneseq
  %v1918 = vshrl.u32 %v1917, 7
  %v1919 = vsub.s32 0, %v1918
  %v1920 = vrot.slane %v34, %v1919
  %v1921 = vadd.f32 %v1915, %v1920
  %v1922 = vadd.f32 %v1916, %v1920
  %1923 = vst.msk [vmem:[%s8] sm:$0xff] %vm43, %v1921
  %1924 = vst.msk [vmem:[%s8 + $0x8] sm:$0xff] %vm43, %v1922
  // Predicated region
  $region34: #{transformer_encoder_layer.1} parent=0 // pred_check
    _
  $region35: #{transformer_encoder_layer.1} parent=0 // pred_check_branch
    %1926 = sbr.rel (0) target = $region37
  $region36: #{transformer_encoder_layer.1} parent=0 // pred_region
    _
  $region37: #{transformer_encoder_layer.1} parent=0 // pred_fallthru
    _
  // Predicated region
  $region38: #{transformer_encoder_layer.1} parent=0 // pred_check
    _
  $region39: #{transformer_encoder_layer.1} parent=0 // pred_check_branch
    %1928 = sbr.rel (0) target = $region41
  $region40: #{transformer_encoder_layer.1} parent=0 // pred_region
    _
  $region41: #{transformer_encoder_layer.1} parent=0 // pred_fallthru
    _

</llo_original>
